<compile_context>
chip_gen: v7x
topology: tpu7x:2x2x1
jax: 0.10.0
libtpu: 0.0.40
codegen_flags: <defaults>
</compile_context>

<pallas_src>
import jax
import jax.numpy as jnp
from jax.experimental import pallas as pl
from jax.experimental.pallas import tpu as pltpu

HIDDEN = 32
NUM_LAYERS = 2
_SUBLANES = 8


def _gru_net_kernel(x_ref, h0_ref, w0_ref, b0_ref, w1_ref, b1_ref,
                    wfc_ref, bfc_ref, out_ref):
    """Full GRUNet forward in one kernel invocation (everything resident in VMEM).

    x_ref:   (T, Bp, F)  f32, time-major
    h0_ref:  (L, Bp, H)  f32
    w0_ref:  (F+H, 4H)   bf16  fused [input|hidden] -> [rz_sum | gi_n | gh_n]
    w1_ref:  (2H, 4H)    bf16
    b0/b1:   (1, 4H)     f32   [b_ih_rz + b_hh_rz | b_ih_n | b_hh_n]
    wfc_ref: (H, H)      bf16  fc weight, transposed & zero-padded to H output lanes
    bfc_ref: (1, H)      f32   fc bias, zero-padded
    out_ref: (Bp, 4H)    f32   packed [fc | h_l0 | h_l1 | 0]   (4H == 128 lanes)
    """
    T, B, _F = x_ref.shape
    H = h0_ref.shape[-1]
    H2, H3 = 2 * H, 3 * H

    # Tiny weights: load once, live in vregs for the whole kernel.
    w0 = w0_ref[...]
    w1 = w1_ref[...]

    # Hoisted bias broadcasts (JAX does not CSE broadcast_in_dim inside the loop).
    b0 = jnp.broadcast_to(b0_ref[...], (B, 4 * H))
    b1 = jnp.broadcast_to(b1_ref[...], (B, 4 * H))

    h_l0 = h0_ref[0]
    h_l1 = h0_ref[1]

    def gru_step(inp, h_prev, w, bias):
        # One fused, 128-lane-dense MXU matmul per layer per step (bf16 in, f32 acc).
        lhs = jnp.concatenate([inp, h_prev], axis=1).astype(w.dtype)
        g = jnp.dot(lhs, w, preferred_element_type=jnp.float32) + bias   # (B, 4H)
        rz = jax.nn.sigmoid(g[:, :H2])          # fused r/z: single EUP pass
        r = rz[:, :H]
        z = rz[:, H:]
        n = jnp.tanh(g[:, H2:H3] + r * g[:, H3:])
        return n + z * (h_prev - n)             # == (1 - z) * n + z * h_prev

    # Fully unrolled time loop: T is small and static, so a Python loop gives the
    # scheduler full cross-step visibility and makes every slice index static.
    for t in range(T):
        h_l0 = gru_step(x_ref[t], h_l0, w0, b0)   # x_ref[t]: free leading-dim slice
        h_l1 = gru_step(h_l0, h_l1, w1, b1)

    # Epilogue: fc on the last top-layer hidden + lane-dense packed output slab.
    bfc = jnp.broadcast_to(bfc_ref[...], (B, H))
    fc = jnp.dot(h_l1.astype(wfc_ref.dtype), wfc_ref[...],
                 preferred_element_type=jnp.float32) + bfc                # (B, H)
    out_ref[...] = jnp.concatenate(
        [fc, h_l0, h_l1, jnp.zeros((B, H), jnp.float32)], axis=1)         # (B, 4H)


def gru_net_forward(x_btf, h0, params):
    """x_btf: (B, T, F) float32, h0: (num_layers, B, H). Returns (out, h_n)."""
    B, T, F = x_btf.shape
    L, _, H = h0.shape
    O = params["w_fc"].shape[0]
    assert L == NUM_LAYERS and O <= H and (4 * H) % 128 == 0

    # Pad batch to a sublane multiple so vregs / MXU rows are not masked.
    Bp = ((B + _SUBLANES - 1) // _SUBLANES) * _SUBLANES
    if Bp != B:
        x_btf = jnp.pad(x_btf, ((0, Bp - B), (0, 0), (0, 0)))
        h0_in = jnp.pad(h0, ((0, 0), (0, Bp - B), (0, 0)))
    else:
        h0_in = h0

    # Time-major so the per-step slice inside the kernel is a leading-dim slice.
    x_tbf = jnp.transpose(x_btf, (1, 0, 2))                    # (T, Bp, F)

    def prep_layer(wih, whh, bih, bhh):
        # Stack the input and hidden projections into one (In+H, 4H) RHS whose
        # output columns are [gi_rz + gh_rz | gi_n | gh_n]; pre-sum the r/z biases.
        In = wih.shape[1]
        wih_t = wih.T                                           # (In, 3H)
        whh_t = whh.T                                           # (H, 3H)
        top = jnp.concatenate(
            [wih_t[:, :2 * H], wih_t[:, 2 * H:], jnp.zeros((In, H), jnp.float32)],
            axis=1)
        bot = jnp.concatenate(
            [whh_t[:, :2 * H], jnp.zeros((H, H), jnp.float32), whh_t[:, 2 * H:]],
            axis=1)
        w = jnp.concatenate([top, bot], axis=0).astype(jnp.bfloat16)   # (In+H, 4H)
        b = jnp.concatenate(
            [bih[:2 * H] + bhh[:2 * H], bih[2 * H:], bhh[2 * H:]])[None, :]
        return w, b

    w0, b0 = prep_layer(params["w_ih_l0"], params["w_hh_l0"],
                        params["b_ih_l0"], params["b_hh_l0"])
    w1, b1 = prep_layer(params["w_ih_l1"], params["w_hh_l1"],
                        params["b_ih_l1"], params["b_hh_l1"])

    # fc weight transposed and zero-padded to H output lanes so the packed output
    # slab is built from H-lane chunks.
    wfc = jnp.pad(params["w_fc"].T, ((0, 0), (0, H - O))).astype(jnp.bfloat16)
    bfc = jnp.pad(params["b_fc"], (0, H - O))[None, :]

    args = (x_tbf, h0_in, w0, b0, w1, b1, wfc, bfc)

    out_shape = jax.ShapeDtypeStruct((Bp, 4 * H), jnp.float32)
    flops = 2 * T * Bp * 4 * H * (F + 3 * H) + 2 * Bp * H * H
    transcendentals = T * Bp * 2 * 3 * H
    bytes_accessed = sum(int(a.size) * a.dtype.itemsize for a in args) \
        + Bp * 4 * H * 4

    vmem = pl.BlockSpec(memory_space=pltpu.MemorySpace.VMEM)
    packed = pl.pallas_call(
        _gru_net_kernel,
        out_shape=out_shape,
        in_specs=[vmem] * len(args),
        out_specs=vmem,
        cost_estimate=pl.CostEstimate(flops=flops,
                                      transcendentals=transcendentals,
                                      bytes_accessed=bytes_accessed),
    )(*args)

    out = packed[:B, :O]
    h_n = jnp.stack([packed[:B, H:2 * H], packed[:B, 2 * H:3 * H]], axis=0)
    return out, h_n


def init_params(key, input_size, hidden_size, output_size):
    """Deterministic PyTorch-style uniform(-1/sqrt(H), 1/sqrt(H)) init."""
    keys = jax.random.split(key, 12)
    k = 1.0 / jnp.sqrt(hidden_size)

    def u(kk, shape):
        return jax.random.uniform(kk, shape, jnp.float32, -k, k)

    return {
        "w_ih_l0": u(keys[0], (3 * hidden_size, input_size)),
        "w_hh_l0": u(keys[1], (3 * hidden_size, hidden_size)),
        "b_ih_l0": u(keys[2], (3 * hidden_size,)),
        "b_hh_l0": u(keys[3], (3 * hidden_size,)),
        "w_ih_l1": u(keys[4], (3 * hidden_size, hidden_size)),
        "w_hh_l1": u(keys[5], (3 * hidden_size, hidden_size)),
        "b_ih_l1": u(keys[6], (3 * hidden_size,)),
        "b_hh_l1": u(keys[7], (3 * hidden_size,)),
        "w_fc": u(keys[8], (output_size, hidden_size)),
        "b_fc": u(keys[9], (output_size,)),
    }


def gru_net_reference(x_btf, h0, params):
    """Pure-JAX f32 reference matching torch.nn.GRU semantics (for verification)."""
    H = h0.shape[-1]

    def cell(x_t, h_prev, wih, whh, bih, bhh):
        gi = x_t @ wih.T + bih
        gh = h_prev @ whh.T + bhh
        r = jax.nn.sigmoid(gi[:, :H] + gh[:, :H])
        z = jax.nn.sigmoid(gi[:, H:2 * H] + gh[:, H:2 * H])
        n = jnp.tanh(gi[:, 2 * H:] + r * gh[:, 2 * H:])
        return (1.0 - z) * n + z * h_prev

    h_l0, h_l1 = h0[0], h0[1]
    T = x_btf.shape[1]
    for t in range(T):
        x_t = x_btf[:, t, :]
        h_l0 = cell(x_t, h_l0, params["w_ih_l0"], params["w_hh_l0"],
                    params["b_ih_l0"], params["b_hh_l0"])
        h_l1 = cell(h_l0, h_l1, params["w_ih_l1"], params["w_hh_l1"],
                    params["b_ih_l1"], params["b_hh_l1"])
    out = h_l1 @ params["w_fc"].T + params["b_fc"]
    return out, jnp.stack([h_l0, h_l1], axis=0)


if __name__ == "__main__":
    B, T, F, O = 2, 8, 16, 4   # batch, seq (padded), input_size, output_size

    key = jax.random.PRNGKey(0)
    k_x, k_h, k_p = jax.random.split(key, 3)
    x = jax.random.normal(k_x, (B, T, F), jnp.float32)
    h0 = jax.random.normal(k_h, (NUM_LAYERS, B, HIDDEN), jnp.float32)
    params = init_params(k_p, F, HIDDEN, O)

    out, h_n = gru_net_forward(x, h0, params)
    out, h_n = jax.block_until_ready((out, h_n))

    out_ref, h_ref = gru_net_reference(x, h0, params)
    # Tolerance relaxed vs. the f32 reference because MXU operands are bf16
    # (f32 accumulation; gate math & recurrent state stay f32).
    assert jnp.allclose(out, out_ref, atol=2e-2, rtol=2e-2)
    assert jnp.allclose(h_n, h_ref, atol=2e-2, rtol=2e-2)

    print("KERNEL_OK")
</pallas_src>

<mosaic_0001>
module attributes {stable_mosaic.version = 11 : i64} {
  func.func @_gru_net_kernel(%arg0: memref<8x8x16xf32, #tpu.memory_space<vmem>>, %arg1: memref<2x8x32xf32, #tpu.memory_space<vmem>>, %arg2: memref<48x128xbf16, #tpu.memory_space<vmem>>, %arg3: memref<1x128xf32, #tpu.memory_space<vmem>>, %arg4: memref<64x128xbf16, #tpu.memory_space<vmem>>, %arg5: memref<1x128xf32, #tpu.memory_space<vmem>>, %arg6: memref<32x32xbf16, #tpu.memory_space<vmem>>, %arg7: memref<1x32xf32, #tpu.memory_space<vmem>>, %arg8: memref<8x128xf32, #tpu.memory_space<vmem>>) attributes {dimension_semantics = [], scalar_prefetch = 0 : i64, scratch_operands = 0 : i64, tpu.core_type = #tpu.core_type<tc>} {
    %c0 = arith.constant 0 : index
    %c0_0 = arith.constant 0 : index
    %0 = vector.load %arg2[%c0, %c0_0] : memref<48x128xbf16, #tpu.memory_space<vmem>>, vector<48x128xbf16>
    %c0_1 = arith.constant 0 : index
    %c0_2 = arith.constant 0 : index
    %1 = vector.load %arg4[%c0_1, %c0_2] : memref<64x128xbf16, #tpu.memory_space<vmem>>, vector<64x128xbf16>
    %c0_3 = arith.constant 0 : index
    %c0_4 = arith.constant 0 : index
    %2 = vector.load %arg3[%c0_3, %c0_4] : memref<1x128xf32, #tpu.memory_space<vmem>>, vector<1x128xf32>
    %3 = vector.shape_cast %2 : vector<1x128xf32> to vector<1x128xf32>
    %4 = vector.broadcast %3 : vector<1x128xf32> to vector<8x128xf32>
    %c0_5 = arith.constant 0 : index
    %c0_6 = arith.constant 0 : index
    %5 = vector.load %arg5[%c0_5, %c0_6] : memref<1x128xf32, #tpu.memory_space<vmem>>, vector<1x128xf32>
    %6 = vector.shape_cast %5 : vector<1x128xf32> to vector<1x128xf32>
    %7 = vector.broadcast %6 : vector<1x128xf32> to vector<8x128xf32>
    %c0_7 = arith.constant 0 : index
    %c0_8 = arith.constant 0 : index
    %c0_9 = arith.constant 0 : index
    %8 = vector.load %arg1[%c0_7, %c0_8, %c0_9] : memref<2x8x32xf32, #tpu.memory_space<vmem>>, vector<1x8x32xf32>
    %9 = vector.shape_cast %8 : vector<1x8x32xf32> to vector<8x32xf32>
    %c1 = arith.constant 1 : index
    %c0_10 = arith.constant 0 : index
    %c0_11 = arith.constant 0 : index
    %10 = vector.load %arg1[%c1, %c0_10, %c0_11] : memref<2x8x32xf32, #tpu.memory_space<vmem>>, vector<1x8x32xf32>
    %11 = vector.shape_cast %10 : vector<1x8x32xf32> to vector<8x32xf32>
    %c0_12 = arith.constant 0 : index
    %c0_13 = arith.constant 0 : index
    %c0_14 = arith.constant 0 : index
    %12 = vector.load %arg0[%c0_12, %c0_13, %c0_14] : memref<8x8x16xf32, #tpu.memory_space<vmem>>, vector<1x8x16xf32>
    %13 = vector.shape_cast %12 : vector<1x8x16xf32> to vector<8x16xf32>
    %14 = tpu.concatenate %13, %9 in 1 : vector<8x16xf32>, vector<8x32xf32> -> vector<8x48xf32>
    %15 = arith.truncf %14 : vector<8x48xf32> to vector<8x48xbf16>
    %cst = arith.constant dense<0.000000e+00> : vector<8x128xf32>
    %16 = tpu.matmul %15, %0, %cst {dimension_numbers = #tpu.dot_dimension_numbers<[1], [0], [0], [1], [0, 0, 1, 1], [], []>} : vector<8x48xbf16>, vector<48x128xbf16>, vector<8x128xf32> -> vector<8x128xf32>
    %17 = arith.addf %16, %4 : vector<8x128xf32>
    %18 = vector.extract_strided_slice %17 {offsets = [0, 0], sizes = [8, 64], strides = [1, 1]} : vector<8x128xf32> to vector<8x64xf32>
    %19 = arith.negf %18 : vector<8x64xf32>
    %20 = math.exp %19 : vector<8x64xf32>
    %cst_15 = arith.constant 1.000000e+00 : f32
    %21 = vector.broadcast %cst_15 : f32 to vector<8x64xf32>
    %22 = arith.addf %21, %20 : vector<8x64xf32>
    %23 = arith.divf %21, %22 : vector<8x64xf32>
    %24 = vector.extract_strided_slice %23 {offsets = [0, 0], sizes = [8, 32], strides = [1, 1]} : vector<8x64xf32> to vector<8x32xf32>
    %25 = vector.extract_strided_slice %23 {offsets = [0, 32], sizes = [8, 32], strides = [1, 1]} : vector<8x64xf32> to vector<8x32xf32>
    %26 = vector.extract_strided_slice %17 {offsets = [0, 64], sizes = [8, 32], strides = [1, 1]} : vector<8x128xf32> to vector<8x32xf32>
    %27 = vector.extract_strided_slice %17 {offsets = [0, 96], sizes = [8, 32], strides = [1, 1]} : vector<8x128xf32> to vector<8x32xf32>
    %28 = arith.mulf %24, %27 : vector<8x32xf32>
    %29 = arith.addf %26, %28 : vector<8x32xf32>
    %30 = math.tanh %29 : vector<8x32xf32>
    %31 = arith.subf %9, %30 : vector<8x32xf32>
    %32 = arith.mulf %25, %31 : vector<8x32xf32>
    %33 = arith.addf %30, %32 : vector<8x32xf32>
    %34 = tpu.concatenate %33, %11 in 1 : vector<8x32xf32>, vector<8x32xf32> -> vector<8x64xf32>
    %35 = arith.truncf %34 : vector<8x64xf32> to vector<8x64xbf16>
    %cst_16 = arith.constant dense<0.000000e+00> : vector<8x128xf32>
    %36 = tpu.matmul %35, %1, %cst_16 {dimension_numbers = #tpu.dot_dimension_numbers<[1], [0], [0], [1], [0, 0, 1, 1], [], []>} : vector<8x64xbf16>, vector<64x128xbf16>, vector<8x128xf32> -> vector<8x128xf32>
    %37 = arith.addf %36, %7 : vector<8x128xf32>
    %38 = vector.extract_strided_slice %37 {offsets = [0, 0], sizes = [8, 64], strides = [1, 1]} : vector<8x128xf32> to vector<8x64xf32>
    %39 = arith.negf %38 : vector<8x64xf32>
    %40 = math.exp %39 : vector<8x64xf32>
    %cst_17 = arith.constant 1.000000e+00 : f32
    %41 = vector.broadcast %cst_17 : f32 to vector<8x64xf32>
    %42 = arith.addf %41, %40 : vector<8x64xf32>
    %43 = arith.divf %41, %42 : vector<8x64xf32>
    %44 = vector.extract_strided_slice %43 {offsets = [0, 0], sizes = [8, 32], strides = [1, 1]} : vector<8x64xf32> to vector<8x32xf32>
    %45 = vector.extract_strided_slice %43 {offsets = [0, 32], sizes = [8, 32], strides = [1, 1]} : vector<8x64xf32> to vector<8x32xf32>
    %46 = vector.extract_strided_slice %37 {offsets = [0, 64], sizes = [8, 32], strides = [1, 1]} : vector<8x128xf32> to vector<8x32xf32>
    %47 = vector.extract_strided_slice %37 {offsets = [0, 96], sizes = [8, 32], strides = [1, 1]} : vector<8x128xf32> to vector<8x32xf32>
    %48 = arith.mulf %44, %47 : vector<8x32xf32>
    %49 = arith.addf %46, %48 : vector<8x32xf32>
    %50 = math.tanh %49 : vector<8x32xf32>
    %51 = arith.subf %11, %50 : vector<8x32xf32>
    %52 = arith.mulf %45, %51 : vector<8x32xf32>
    %53 = arith.addf %50, %52 : vector<8x32xf32>
    %c1_18 = arith.constant 1 : index
    %c0_19 = arith.constant 0 : index
    %c0_20 = arith.constant 0 : index
    %54 = vector.load %arg0[%c1_18, %c0_19, %c0_20] : memref<8x8x16xf32, #tpu.memory_space<vmem>>, vector<1x8x16xf32>
    %55 = vector.shape_cast %54 : vector<1x8x16xf32> to vector<8x16xf32>
    %56 = tpu.concatenate %55, %33 in 1 : vector<8x16xf32>, vector<8x32xf32> -> vector<8x48xf32>
    %57 = arith.truncf %56 : vector<8x48xf32> to vector<8x48xbf16>
    %cst_21 = arith.constant dense<0.000000e+00> : vector<8x128xf32>
    %58 = tpu.matmul %57, %0, %cst_21 {dimension_numbers = #tpu.dot_dimension_numbers<[1], [0], [0], [1], [0, 0, 1, 1], [], []>} : vector<8x48xbf16>, vector<48x128xbf16>, vector<8x128xf32> -> vector<8x128xf32>
    %59 = arith.addf %58, %4 : vector<8x128xf32>
    %60 = vector.extract_strided_slice %59 {offsets = [0, 0], sizes = [8, 64], strides = [1, 1]} : vector<8x128xf32> to vector<8x64xf32>
    %61 = arith.negf %60 : vector<8x64xf32>
    %62 = math.exp %61 : vector<8x64xf32>
    %cst_22 = arith.constant 1.000000e+00 : f32
    %63 = vector.broadcast %cst_22 : f32 to vector<8x64xf32>
    %64 = arith.addf %63, %62 : vector<8x64xf32>
    %65 = arith.divf %63, %64 : vector<8x64xf32>
    %66 = vector.extract_strided_slice %65 {offsets = [0, 0], sizes = [8, 32], strides = [1, 1]} : vector<8x64xf32> to vector<8x32xf32>
    %67 = vector.extract_strided_slice %65 {offsets = [0, 32], sizes = [8, 32], strides = [1, 1]} : vector<8x64xf32> to vector<8x32xf32>
    %68 = vector.extract_strided_slice %59 {offsets = [0, 64], sizes = [8, 32], strides = [1, 1]} : vector<8x128xf32> to vector<8x32xf32>
    %69 = vector.extract_strided_slice %59 {offsets = [0, 96], sizes = [8, 32], strides = [1, 1]} : vector<8x128xf32> to vector<8x32xf32>
    %70 = arith.mulf %66, %69 : vector<8x32xf32>
    %71 = arith.addf %68, %70 : vector<8x32xf32>
    %72 = math.tanh %71 : vector<8x32xf32>
    %73 = arith.subf %33, %72 : vector<8x32xf32>
    %74 = arith.mulf %67, %73 : vector<8x32xf32>
    %75 = arith.addf %72, %74 : vector<8x32xf32>
    %76 = tpu.concatenate %75, %53 in 1 : vector<8x32xf32>, vector<8x32xf32> -> vector<8x64xf32>
    %77 = arith.truncf %76 : vector<8x64xf32> to vector<8x64xbf16>
    %cst_23 = arith.constant dense<0.000000e+00> : vector<8x128xf32>
    %78 = tpu.matmul %77, %1, %cst_23 {dimension_numbers = #tpu.dot_dimension_numbers<[1], [0], [0], [1], [0, 0, 1, 1], [], []>} : vector<8x64xbf16>, vector<64x128xbf16>, vector<8x128xf32> -> vector<8x128xf32>
    %79 = arith.addf %78, %7 : vector<8x128xf32>
    %80 = vector.extract_strided_slice %79 {offsets = [0, 0], sizes = [8, 64], strides = [1, 1]} : vector<8x128xf32> to vector<8x64xf32>
    %81 = arith.negf %80 : vector<8x64xf32>
    %82 = math.exp %81 : vector<8x64xf32>
    %cst_24 = arith.constant 1.000000e+00 : f32
    %83 = vector.broadcast %cst_24 : f32 to vector<8x64xf32>
    %84 = arith.addf %83, %82 : vector<8x64xf32>
    %85 = arith.divf %83, %84 : vector<8x64xf32>
    %86 = vector.extract_strided_slice %85 {offsets = [0, 0], sizes = [8, 32], strides = [1, 1]} : vector<8x64xf32> to vector<8x32xf32>
    %87 = vector.extract_strided_slice %85 {offsets = [0, 32], sizes = [8, 32], strides = [1, 1]} : vector<8x64xf32> to vector<8x32xf32>
    %88 = vector.extract_strided_slice %79 {offsets = [0, 64], sizes = [8, 32], strides = [1, 1]} : vector<8x128xf32> to vector<8x32xf32>
    %89 = vector.extract_strided_slice %79 {offsets = [0, 96], sizes = [8, 32], strides = [1, 1]} : vector<8x128xf32> to vector<8x32xf32>
    %90 = arith.mulf %86, %89 : vector<8x32xf32>
    %91 = arith.addf %88, %90 : vector<8x32xf32>
    %92 = math.tanh %91 : vector<8x32xf32>
    %93 = arith.subf %53, %92 : vector<8x32xf32>
    %94 = arith.mulf %87, %93 : vector<8x32xf32>
    %95 = arith.addf %92, %94 : vector<8x32xf32>
    %c2 = arith.constant 2 : index
    %c0_25 = arith.constant 0 : index
    %c0_26 = arith.constant 0 : index
    %96 = vector.load %arg0[%c2, %c0_25, %c0_26] : memref<8x8x16xf32, #tpu.memory_space<vmem>>, vector<1x8x16xf32>
    %97 = vector.shape_cast %96 : vector<1x8x16xf32> to vector<8x16xf32>
    %98 = tpu.concatenate %97, %75 in 1 : vector<8x16xf32>, vector<8x32xf32> -> vector<8x48xf32>
    %99 = arith.truncf %98 : vector<8x48xf32> to vector<8x48xbf16>
    %cst_27 = arith.constant dense<0.000000e+00> : vector<8x128xf32>
    %100 = tpu.matmul %99, %0, %cst_27 {dimension_numbers = #tpu.dot_dimension_numbers<[1], [0], [0], [1], [0, 0, 1, 1], [], []>} : vector<8x48xbf16>, vector<48x128xbf16>, vector<8x128xf32> -> vector<8x128xf32>
    %101 = arith.addf %100, %4 : vector<8x128xf32>
    %102 = vector.extract_strided_slice %101 {offsets = [0, 0], sizes = [8, 64], strides = [1, 1]} : vector<8x128xf32> to vector<8x64xf32>
    %103 = arith.negf %102 : vector<8x64xf32>
    %104 = math.exp %103 : vector<8x64xf32>
    %cst_28 = arith.constant 1.000000e+00 : f32
    %105 = vector.broadcast %cst_28 : f32 to vector<8x64xf32>
    %106 = arith.addf %105, %104 : vector<8x64xf32>
    %107 = arith.divf %105, %106 : vector<8x64xf32>
    %108 = vector.extract_strided_slice %107 {offsets = [0, 0], sizes = [8, 32], strides = [1, 1]} : vector<8x64xf32> to vector<8x32xf32>
    %109 = vector.extract_strided_slice %107 {offsets = [0, 32], sizes = [8, 32], strides = [1, 1]} : vector<8x64xf32> to vector<8x32xf32>
    %110 = vector.extract_strided_slice %101 {offsets = [0, 64], sizes = [8, 32], strides = [1, 1]} : vector<8x128xf32> to vector<8x32xf32>
    %111 = vector.extract_strided_slice %101 {offsets = [0, 96], sizes = [8, 32], strides = [1, 1]} : vector<8x128xf32> to vector<8x32xf32>
    %112 = arith.mulf %108, %111 : vector<8x32xf32>
    %113 = arith.addf %110, %112 : vector<8x32xf32>
    %114 = math.tanh %113 : vector<8x32xf32>
    %115 = arith.subf %75, %114 : vector<8x32xf32>
    %116 = arith.mulf %109, %115 : vector<8x32xf32>
    %117 = arith.addf %114, %116 : vector<8x32xf32>
    %118 = tpu.concatenate %117, %95 in 1 : vector<8x32xf32>, vector<8x32xf32> -> vector<8x64xf32>
    %119 = arith.truncf %118 : vector<8x64xf32> to vector<8x64xbf16>
    %cst_29 = arith.constant dense<0.000000e+00> : vector<8x128xf32>
    %120 = tpu.matmul %119, %1, %cst_29 {dimension_numbers = #tpu.dot_dimension_numbers<[1], [0], [0], [1], [0, 0, 1, 1], [], []>} : vector<8x64xbf16>, vector<64x128xbf16>, vector<8x128xf32> -> vector<8x128xf32>
    %121 = arith.addf %120, %7 : vector<8x128xf32>
    %122 = vector.extract_strided_slice %121 {offsets = [0, 0], sizes = [8, 64], strides = [1, 1]} : vector<8x128xf32> to vector<8x64xf32>
    %123 = arith.negf %122 : vector<8x64xf32>
    %124 = math.exp %123 : vector<8x64xf32>
    %cst_30 = arith.constant 1.000000e+00 : f32
    %125 = vector.broadcast %cst_30 : f32 to vector<8x64xf32>
    %126 = arith.addf %125, %124 : vector<8x64xf32>
    %127 = arith.divf %125, %126 : vector<8x64xf32>
    %128 = vector.extract_strided_slice %127 {offsets = [0, 0], sizes = [8, 32], strides = [1, 1]} : vector<8x64xf32> to vector<8x32xf32>
    %129 = vector.extract_strided_slice %127 {offsets = [0, 32], sizes = [8, 32], strides = [1, 1]} : vector<8x64xf32> to vector<8x32xf32>
    %130 = vector.extract_strided_slice %121 {offsets = [0, 64], sizes = [8, 32], strides = [1, 1]} : vector<8x128xf32> to vector<8x32xf32>
    %131 = vector.extract_strided_slice %121 {offsets = [0, 96], sizes = [8, 32], strides = [1, 1]} : vector<8x128xf32> to vector<8x32xf32>
    %132 = arith.mulf %128, %131 : vector<8x32xf32>
    %133 = arith.addf %130, %132 : vector<8x32xf32>
    %134 = math.tanh %133 : vector<8x32xf32>
    %135 = arith.subf %95, %134 : vector<8x32xf32>
    %136 = arith.mulf %129, %135 : vector<8x32xf32>
    %137 = arith.addf %134, %136 : vector<8x32xf32>
    %c3 = arith.constant 3 : index
    %c0_31 = arith.constant 0 : index
    %c0_32 = arith.constant 0 : index
    %138 = vector.load %arg0[%c3, %c0_31, %c0_32] : memref<8x8x16xf32, #tpu.memory_space<vmem>>, vector<1x8x16xf32>
    %139 = vector.shape_cast %138 : vector<1x8x16xf32> to vector<8x16xf32>
    %140 = tpu.concatenate %139, %117 in 1 : vector<8x16xf32>, vector<8x32xf32> -> vector<8x48xf32>
    %141 = arith.truncf %140 : vector<8x48xf32> to vector<8x48xbf16>
    %cst_33 = arith.constant dense<0.000000e+00> : vector<8x128xf32>
    %142 = tpu.matmul %141, %0, %cst_33 {dimension_numbers = #tpu.dot_dimension_numbers<[1], [0], [0], [1], [0, 0, 1, 1], [], []>} : vector<8x48xbf16>, vector<48x128xbf16>, vector<8x128xf32> -> vector<8x128xf32>
    %143 = arith.addf %142, %4 : vector<8x128xf32>
    %144 = vector.extract_strided_slice %143 {offsets = [0, 0], sizes = [8, 64], strides = [1, 1]} : vector<8x128xf32> to vector<8x64xf32>
    %145 = arith.negf %144 : vector<8x64xf32>
    %146 = math.exp %145 : vector<8x64xf32>
    %cst_34 = arith.constant 1.000000e+00 : f32
    %147 = vector.broadcast %cst_34 : f32 to vector<8x64xf32>
    %148 = arith.addf %147, %146 : vector<8x64xf32>
    %149 = arith.divf %147, %148 : vector<8x64xf32>
    %150 = vector.extract_strided_slice %149 {offsets = [0, 0], sizes = [8, 32], strides = [1, 1]} : vector<8x64xf32> to vector<8x32xf32>
    %151 = vector.extract_strided_slice %149 {offsets = [0, 32], sizes = [8, 32], strides = [1, 1]} : vector<8x64xf32> to vector<8x32xf32>
    %152 = vector.extract_strided_slice %143 {offsets = [0, 64], sizes = [8, 32], strides = [1, 1]} : vector<8x128xf32> to vector<8x32xf32>
    %153 = vector.extract_strided_slice %143 {offsets = [0, 96], sizes = [8, 32], strides = [1, 1]} : vector<8x128xf32> to vector<8x32xf32>
    %154 = arith.mulf %150, %153 : vector<8x32xf32>
    %155 = arith.addf %152, %154 : vector<8x32xf32>
    %156 = math.tanh %155 : vector<8x32xf32>
    %157 = arith.subf %117, %156 : vector<8x32xf32>
    %158 = arith.mulf %151, %157 : vector<8x32xf32>
    %159 = arith.addf %156, %158 : vector<8x32xf32>
    %160 = tpu.concatenate %159, %137 in 1 : vector<8x32xf32>, vector<8x32xf32> -> vector<8x64xf32>
    %161 = arith.truncf %160 : vector<8x64xf32> to vector<8x64xbf16>
    %cst_35 = arith.constant dense<0.000000e+00> : vector<8x128xf32>
    %162 = tpu.matmul %161, %1, %cst_35 {dimension_numbers = #tpu.dot_dimension_numbers<[1], [0], [0], [1], [0, 0, 1, 1], [], []>} : vector<8x64xbf16>, vector<64x128xbf16>, vector<8x128xf32> -> vector<8x128xf32>
    %163 = arith.addf %162, %7 : vector<8x128xf32>
    %164 = vector.extract_strided_slice %163 {offsets = [0, 0], sizes = [8, 64], strides = [1, 1]} : vector<8x128xf32> to vector<8x64xf32>
    %165 = arith.negf %164 : vector<8x64xf32>
    %166 = math.exp %165 : vector<8x64xf32>
    %cst_36 = arith.constant 1.000000e+00 : f32
    %167 = vector.broadcast %cst_36 : f32 to vector<8x64xf32>
    %168 = arith.addf %167, %166 : vector<8x64xf32>
    %169 = arith.divf %167, %168 : vector<8x64xf32>
    %170 = vector.extract_strided_slice %169 {offsets = [0, 0], sizes = [8, 32], strides = [1, 1]} : vector<8x64xf32> to vector<8x32xf32>
    %171 = vector.extract_strided_slice %169 {offsets = [0, 32], sizes = [8, 32], strides = [1, 1]} : vector<8x64xf32> to vector<8x32xf32>
    %172 = vector.extract_strided_slice %163 {offsets = [0, 64], sizes = [8, 32], strides = [1, 1]} : vector<8x128xf32> to vector<8x32xf32>
    %173 = vector.extract_strided_slice %163 {offsets = [0, 96], sizes = [8, 32], strides = [1, 1]} : vector<8x128xf32> to vector<8x32xf32>
    %174 = arith.mulf %170, %173 : vector<8x32xf32>
    %175 = arith.addf %172, %174 : vector<8x32xf32>
    %176 = math.tanh %175 : vector<8x32xf32>
    %177 = arith.subf %137, %176 : vector<8x32xf32>
    %178 = arith.mulf %171, %177 : vector<8x32xf32>
    %179 = arith.addf %176, %178 : vector<8x32xf32>
    %c4 = arith.constant 4 : index
    %c0_37 = arith.constant 0 : index
    %c0_38 = arith.constant 0 : index
    %180 = vector.load %arg0[%c4, %c0_37, %c0_38] : memref<8x8x16xf32, #tpu.memory_space<vmem>>, vector<1x8x16xf32>
    %181 = vector.shape_cast %180 : vector<1x8x16xf32> to vector<8x16xf32>
    %182 = tpu.concatenate %181, %159 in 1 : vector<8x16xf32>, vector<8x32xf32> -> vector<8x48xf32>
    %183 = arith.truncf %182 : vector<8x48xf32> to vector<8x48xbf16>
    %cst_39 = arith.constant dense<0.000000e+00> : vector<8x128xf32>
    %184 = tpu.matmul %183, %0, %cst_39 {dimension_numbers = #tpu.dot_dimension_numbers<[1], [0], [0], [1], [0, 0, 1, 1], [], []>} : vector<8x48xbf16>, vector<48x128xbf16>, vector<8x128xf32> -> vector<8x128xf32>
    %185 = arith.addf %184, %4 : vector<8x128xf32>
    %186 = vector.extract_strided_slice %185 {offsets = [0, 0], sizes = [8, 64], strides = [1, 1]} : vector<8x128xf32> to vector<8x64xf32>
    %187 = arith.negf %186 : vector<8x64xf32>
    %188 = math.exp %187 : vector<8x64xf32>
    %cst_40 = arith.constant 1.000000e+00 : f32
    %189 = vector.broadcast %cst_40 : f32 to vector<8x64xf32>
    %190 = arith.addf %189, %188 : vector<8x64xf32>
    %191 = arith.divf %189, %190 : vector<8x64xf32>
    %192 = vector.extract_strided_slice %191 {offsets = [0, 0], sizes = [8, 32], strides = [1, 1]} : vector<8x64xf32> to vector<8x32xf32>
    %193 = vector.extract_strided_slice %191 {offsets = [0, 32], sizes = [8, 32], strides = [1, 1]} : vector<8x64xf32> to vector<8x32xf32>
    %194 = vector.extract_strided_slice %185 {offsets = [0, 64], sizes = [8, 32], strides = [1, 1]} : vector<8x128xf32> to vector<8x32xf32>
    %195 = vector.extract_strided_slice %185 {offsets = [0, 96], sizes = [8, 32], strides = [1, 1]} : vector<8x128xf32> to vector<8x32xf32>
    %196 = arith.mulf %192, %195 : vector<8x32xf32>
    %197 = arith.addf %194, %196 : vector<8x32xf32>
    %198 = math.tanh %197 : vector<8x32xf32>
    %199 = arith.subf %159, %198 : vector<8x32xf32>
    %200 = arith.mulf %193, %199 : vector<8x32xf32>
    %201 = arith.addf %198, %200 : vector<8x32xf32>
    %202 = tpu.concatenate %201, %179 in 1 : vector<8x32xf32>, vector<8x32xf32> -> vector<8x64xf32>
    %203 = arith.truncf %202 : vector<8x64xf32> to vector<8x64xbf16>
    %cst_41 = arith.constant dense<0.000000e+00> : vector<8x128xf32>
    %204 = tpu.matmul %203, %1, %cst_41 {dimension_numbers = #tpu.dot_dimension_numbers<[1], [0], [0], [1], [0, 0, 1, 1], [], []>} : vector<8x64xbf16>, vector<64x128xbf16>, vector<8x128xf32> -> vector<8x128xf32>
    %205 = arith.addf %204, %7 : vector<8x128xf32>
    %206 = vector.extract_strided_slice %205 {offsets = [0, 0], sizes = [8, 64], strides = [1, 1]} : vector<8x128xf32> to vector<8x64xf32>
    %207 = arith.negf %206 : vector<8x64xf32>
    %208 = math.exp %207 : vector<8x64xf32>
    %cst_42 = arith.constant 1.000000e+00 : f32
    %209 = vector.broadcast %cst_42 : f32 to vector<8x64xf32>
    %210 = arith.addf %209, %208 : vector<8x64xf32>
    %211 = arith.divf %209, %210 : vector<8x64xf32>
    %212 = vector.extract_strided_slice %211 {offsets = [0, 0], sizes = [8, 32], strides = [1, 1]} : vector<8x64xf32> to vector<8x32xf32>
    %213 = vector.extract_strided_slice %211 {offsets = [0, 32], sizes = [8, 32], strides = [1, 1]} : vector<8x64xf32> to vector<8x32xf32>
    %214 = vector.extract_strided_slice %205 {offsets = [0, 64], sizes = [8, 32], strides = [1, 1]} : vector<8x128xf32> to vector<8x32xf32>
    %215 = vector.extract_strided_slice %205 {offsets = [0, 96], sizes = [8, 32], strides = [1, 1]} : vector<8x128xf32> to vector<8x32xf32>
    %216 = arith.mulf %212, %215 : vector<8x32xf32>
    %217 = arith.addf %214, %216 : vector<8x32xf32>
    %218 = math.tanh %217 : vector<8x32xf32>
    %219 = arith.subf %179, %218 : vector<8x32xf32>
    %220 = arith.mulf %213, %219 : vector<8x32xf32>
    %221 = arith.addf %218, %220 : vector<8x32xf32>
    %c5 = arith.constant 5 : index
    %c0_43 = arith.constant 0 : index
    %c0_44 = arith.constant 0 : index
    %222 = vector.load %arg0[%c5, %c0_43, %c0_44] : memref<8x8x16xf32, #tpu.memory_space<vmem>>, vector<1x8x16xf32>
    %223 = vector.shape_cast %222 : vector<1x8x16xf32> to vector<8x16xf32>
    %224 = tpu.concatenate %223, %201 in 1 : vector<8x16xf32>, vector<8x32xf32> -> vector<8x48xf32>
    %225 = arith.truncf %224 : vector<8x48xf32> to vector<8x48xbf16>
    %cst_45 = arith.constant dense<0.000000e+00> : vector<8x128xf32>
    %226 = tpu.matmul %225, %0, %cst_45 {dimension_numbers = #tpu.dot_dimension_numbers<[1], [0], [0], [1], [0, 0, 1, 1], [], []>} : vector<8x48xbf16>, vector<48x128xbf16>, vector<8x128xf32> -> vector<8x128xf32>
    %227 = arith.addf %226, %4 : vector<8x128xf32>
    %228 = vector.extract_strided_slice %227 {offsets = [0, 0], sizes = [8, 64], strides = [1, 1]} : vector<8x128xf32> to vector<8x64xf32>
    %229 = arith.negf %228 : vector<8x64xf32>
    %230 = math.exp %229 : vector<8x64xf32>
    %cst_46 = arith.constant 1.000000e+00 : f32
    %231 = vector.broadcast %cst_46 : f32 to vector<8x64xf32>
    %232 = arith.addf %231, %230 : vector<8x64xf32>
    %233 = arith.divf %231, %232 : vector<8x64xf32>
    %234 = vector.extract_strided_slice %233 {offsets = [0, 0], sizes = [8, 32], strides = [1, 1]} : vector<8x64xf32> to vector<8x32xf32>
    %235 = vector.extract_strided_slice %233 {offsets = [0, 32], sizes = [8, 32], strides = [1, 1]} : vector<8x64xf32> to vector<8x32xf32>
    %236 = vector.extract_strided_slice %227 {offsets = [0, 64], sizes = [8, 32], strides = [1, 1]} : vector<8x128xf32> to vector<8x32xf32>
    %237 = vector.extract_strided_slice %227 {offsets = [0, 96], sizes = [8, 32], strides = [1, 1]} : vector<8x128xf32> to vector<8x32xf32>
    %238 = arith.mulf %234, %237 : vector<8x32xf32>
    %239 = arith.addf %236, %238 : vector<8x32xf32>
    %240 = math.tanh %239 : vector<8x32xf32>
    %241 = arith.subf %201, %240 : vector<8x32xf32>
    %242 = arith.mulf %235, %241 : vector<8x32xf32>
    %243 = arith.addf %240, %242 : vector<8x32xf32>
    %244 = tpu.concatenate %243, %221 in 1 : vector<8x32xf32>, vector<8x32xf32> -> vector<8x64xf32>
    %245 = arith.truncf %244 : vector<8x64xf32> to vector<8x64xbf16>
    %cst_47 = arith.constant dense<0.000000e+00> : vector<8x128xf32>
    %246 = tpu.matmul %245, %1, %cst_47 {dimension_numbers = #tpu.dot_dimension_numbers<[1], [0], [0], [1], [0, 0, 1, 1], [], []>} : vector<8x64xbf16>, vector<64x128xbf16>, vector<8x128xf32> -> vector<8x128xf32>
    %247 = arith.addf %246, %7 : vector<8x128xf32>
    %248 = vector.extract_strided_slice %247 {offsets = [0, 0], sizes = [8, 64], strides = [1, 1]} : vector<8x128xf32> to vector<8x64xf32>
    %249 = arith.negf %248 : vector<8x64xf32>
    %250 = math.exp %249 : vector<8x64xf32>
    %cst_48 = arith.constant 1.000000e+00 : f32
    %251 = vector.broadcast %cst_48 : f32 to vector<8x64xf32>
    %252 = arith.addf %251, %250 : vector<8x64xf32>
    %253 = arith.divf %251, %252 : vector<8x64xf32>
    %254 = vector.extract_strided_slice %253 {offsets = [0, 0], sizes = [8, 32], strides = [1, 1]} : vector<8x64xf32> to vector<8x32xf32>
    %255 = vector.extract_strided_slice %253 {offsets = [0, 32], sizes = [8, 32], strides = [1, 1]} : vector<8x64xf32> to vector<8x32xf32>
    %256 = vector.extract_strided_slice %247 {offsets = [0, 64], sizes = [8, 32], strides = [1, 1]} : vector<8x128xf32> to vector<8x32xf32>
    %257 = vector.extract_strided_slice %247 {offsets = [0, 96], sizes = [8, 32], strides = [1, 1]} : vector<8x128xf32> to vector<8x32xf32>
    %258 = arith.mulf %254, %257 : vector<8x32xf32>
    %259 = arith.addf %256, %258 : vector<8x32xf32>
    %260 = math.tanh %259 : vector<8x32xf32>
    %261 = arith.subf %221, %260 : vector<8x32xf32>
    %262 = arith.mulf %255, %261 : vector<8x32xf32>
    %263 = arith.addf %260, %262 : vector<8x32xf32>
    %c6 = arith.constant 6 : index
    %c0_49 = arith.constant 0 : index
    %c0_50 = arith.constant 0 : index
    %264 = vector.load %arg0[%c6, %c0_49, %c0_50] : memref<8x8x16xf32, #tpu.memory_space<vmem>>, vector<1x8x16xf32>
    %265 = vector.shape_cast %264 : vector<1x8x16xf32> to vector<8x16xf32>
    %266 = tpu.concatenate %265, %243 in 1 : vector<8x16xf32>, vector<8x32xf32> -> vector<8x48xf32>
    %267 = arith.truncf %266 : vector<8x48xf32> to vector<8x48xbf16>
    %cst_51 = arith.constant dense<0.000000e+00> : vector<8x128xf32>
    %268 = tpu.matmul %267, %0, %cst_51 {dimension_numbers = #tpu.dot_dimension_numbers<[1], [0], [0], [1], [0, 0, 1, 1], [], []>} : vector<8x48xbf16>, vector<48x128xbf16>, vector<8x128xf32> -> vector<8x128xf32>
    %269 = arith.addf %268, %4 : vector<8x128xf32>
    %270 = vector.extract_strided_slice %269 {offsets = [0, 0], sizes = [8, 64], strides = [1, 1]} : vector<8x128xf32> to vector<8x64xf32>
    %271 = arith.negf %270 : vector<8x64xf32>
    %272 = math.exp %271 : vector<8x64xf32>
    %cst_52 = arith.constant 1.000000e+00 : f32
    %273 = vector.broadcast %cst_52 : f32 to vector<8x64xf32>
    %274 = arith.addf %273, %272 : vector<8x64xf32>
    %275 = arith.divf %273, %274 : vector<8x64xf32>
    %276 = vector.extract_strided_slice %275 {offsets = [0, 0], sizes = [8, 32], strides = [1, 1]} : vector<8x64xf32> to vector<8x32xf32>
    %277 = vector.extract_strided_slice %275 {offsets = [0, 32], sizes = [8, 32], strides = [1, 1]} : vector<8x64xf32> to vector<8x32xf32>
    %278 = vector.extract_strided_slice %269 {offsets = [0, 64], sizes = [8, 32], strides = [1, 1]} : vector<8x128xf32> to vector<8x32xf32>
    %279 = vector.extract_strided_slice %269 {offsets = [0, 96], sizes = [8, 32], strides = [1, 1]} : vector<8x128xf32> to vector<8x32xf32>
    %280 = arith.mulf %276, %279 : vector<8x32xf32>
    %281 = arith.addf %278, %280 : vector<8x32xf32>
    %282 = math.tanh %281 : vector<8x32xf32>
    %283 = arith.subf %243, %282 : vector<8x32xf32>
    %284 = arith.mulf %277, %283 : vector<8x32xf32>
    %285 = arith.addf %282, %284 : vector<8x32xf32>
    %286 = tpu.concatenate %285, %263 in 1 : vector<8x32xf32>, vector<8x32xf32> -> vector<8x64xf32>
    %287 = arith.truncf %286 : vector<8x64xf32> to vector<8x64xbf16>
    %cst_53 = arith.constant dense<0.000000e+00> : vector<8x128xf32>
    %288 = tpu.matmul %287, %1, %cst_53 {dimension_numbers = #tpu.dot_dimension_numbers<[1], [0], [0], [1], [0, 0, 1, 1], [], []>} : vector<8x64xbf16>, vector<64x128xbf16>, vector<8x128xf32> -> vector<8x128xf32>
    %289 = arith.addf %288, %7 : vector<8x128xf32>
    %290 = vector.extract_strided_slice %289 {offsets = [0, 0], sizes = [8, 64], strides = [1, 1]} : vector<8x128xf32> to vector<8x64xf32>
    %291 = arith.negf %290 : vector<8x64xf32>
    %292 = math.exp %291 : vector<8x64xf32>
    %cst_54 = arith.constant 1.000000e+00 : f32
    %293 = vector.broadcast %cst_54 : f32 to vector<8x64xf32>
    %294 = arith.addf %293, %292 : vector<8x64xf32>
    %295 = arith.divf %293, %294 : vector<8x64xf32>
    %296 = vector.extract_strided_slice %295 {offsets = [0, 0], sizes = [8, 32], strides = [1, 1]} : vector<8x64xf32> to vector<8x32xf32>
    %297 = vector.extract_strided_slice %295 {offsets = [0, 32], sizes = [8, 32], strides = [1, 1]} : vector<8x64xf32> to vector<8x32xf32>
    %298 = vector.extract_strided_slice %289 {offsets = [0, 64], sizes = [8, 32], strides = [1, 1]} : vector<8x128xf32> to vector<8x32xf32>
    %299 = vector.extract_strided_slice %289 {offsets = [0, 96], sizes = [8, 32], strides = [1, 1]} : vector<8x128xf32> to vector<8x32xf32>
    %300 = arith.mulf %296, %299 : vector<8x32xf32>
    %301 = arith.addf %298, %300 : vector<8x32xf32>
    %302 = math.tanh %301 : vector<8x32xf32>
    %303 = arith.subf %263, %302 : vector<8x32xf32>
    %304 = arith.mulf %297, %303 : vector<8x32xf32>
    %305 = arith.addf %302, %304 : vector<8x32xf32>
    %c7 = arith.constant 7 : index
    %c0_55 = arith.constant 0 : index
    %c0_56 = arith.constant 0 : index
    %306 = vector.load %arg0[%c7, %c0_55, %c0_56] : memref<8x8x16xf32, #tpu.memory_space<vmem>>, vector<1x8x16xf32>
    %307 = vector.shape_cast %306 : vector<1x8x16xf32> to vector<8x16xf32>
    %308 = tpu.concatenate %307, %285 in 1 : vector<8x16xf32>, vector<8x32xf32> -> vector<8x48xf32>
    %309 = arith.truncf %308 : vector<8x48xf32> to vector<8x48xbf16>
    %cst_57 = arith.constant dense<0.000000e+00> : vector<8x128xf32>
    %310 = tpu.matmul %309, %0, %cst_57 {dimension_numbers = #tpu.dot_dimension_numbers<[1], [0], [0], [1], [0, 0, 1, 1], [], []>} : vector<8x48xbf16>, vector<48x128xbf16>, vector<8x128xf32> -> vector<8x128xf32>
    %311 = arith.addf %310, %4 : vector<8x128xf32>
    %312 = vector.extract_strided_slice %311 {offsets = [0, 0], sizes = [8, 64], strides = [1, 1]} : vector<8x128xf32> to vector<8x64xf32>
    %313 = arith.negf %312 : vector<8x64xf32>
    %314 = math.exp %313 : vector<8x64xf32>
    %cst_58 = arith.constant 1.000000e+00 : f32
    %315 = vector.broadcast %cst_58 : f32 to vector<8x64xf32>
    %316 = arith.addf %315, %314 : vector<8x64xf32>
    %317 = arith.divf %315, %316 : vector<8x64xf32>
    %318 = vector.extract_strided_slice %317 {offsets = [0, 0], sizes = [8, 32], strides = [1, 1]} : vector<8x64xf32> to vector<8x32xf32>
    %319 = vector.extract_strided_slice %317 {offsets = [0, 32], sizes = [8, 32], strides = [1, 1]} : vector<8x64xf32> to vector<8x32xf32>
    %320 = vector.extract_strided_slice %311 {offsets = [0, 64], sizes = [8, 32], strides = [1, 1]} : vector<8x128xf32> to vector<8x32xf32>
    %321 = vector.extract_strided_slice %311 {offsets = [0, 96], sizes = [8, 32], strides = [1, 1]} : vector<8x128xf32> to vector<8x32xf32>
    %322 = arith.mulf %318, %321 : vector<8x32xf32>
    %323 = arith.addf %320, %322 : vector<8x32xf32>
    %324 = math.tanh %323 : vector<8x32xf32>
    %325 = arith.subf %285, %324 : vector<8x32xf32>
    %326 = arith.mulf %319, %325 : vector<8x32xf32>
    %327 = arith.addf %324, %326 : vector<8x32xf32>
    %328 = tpu.concatenate %327, %305 in 1 : vector<8x32xf32>, vector<8x32xf32> -> vector<8x64xf32>
    %329 = arith.truncf %328 : vector<8x64xf32> to vector<8x64xbf16>
    %cst_59 = arith.constant dense<0.000000e+00> : vector<8x128xf32>
    %330 = tpu.matmul %329, %1, %cst_59 {dimension_numbers = #tpu.dot_dimension_numbers<[1], [0], [0], [1], [0, 0, 1, 1], [], []>} : vector<8x64xbf16>, vector<64x128xbf16>, vector<8x128xf32> -> vector<8x128xf32>
    %331 = arith.addf %330, %7 : vector<8x128xf32>
    %332 = vector.extract_strided_slice %331 {offsets = [0, 0], sizes = [8, 64], strides = [1, 1]} : vector<8x128xf32> to vector<8x64xf32>
    %333 = arith.negf %332 : vector<8x64xf32>
    %334 = math.exp %333 : vector<8x64xf32>
    %cst_60 = arith.constant 1.000000e+00 : f32
    %335 = vector.broadcast %cst_60 : f32 to vector<8x64xf32>
    %336 = arith.addf %335, %334 : vector<8x64xf32>
    %337 = arith.divf %335, %336 : vector<8x64xf32>
    %338 = vector.extract_strided_slice %337 {offsets = [0, 0], sizes = [8, 32], strides = [1, 1]} : vector<8x64xf32> to vector<8x32xf32>
    %339 = vector.extract_strided_slice %337 {offsets = [0, 32], sizes = [8, 32], strides = [1, 1]} : vector<8x64xf32> to vector<8x32xf32>
    %340 = vector.extract_strided_slice %331 {offsets = [0, 64], sizes = [8, 32], strides = [1, 1]} : vector<8x128xf32> to vector<8x32xf32>
    %341 = vector.extract_strided_slice %331 {offsets = [0, 96], sizes = [8, 32], strides = [1, 1]} : vector<8x128xf32> to vector<8x32xf32>
    %342 = arith.mulf %338, %341 : vector<8x32xf32>
    %343 = arith.addf %340, %342 : vector<8x32xf32>
    %344 = math.tanh %343 : vector<8x32xf32>
    %345 = arith.subf %305, %344 : vector<8x32xf32>
    %346 = arith.mulf %339, %345 : vector<8x32xf32>
    %347 = arith.addf %344, %346 : vector<8x32xf32>
    %c0_61 = arith.constant 0 : index
    %c0_62 = arith.constant 0 : index
    %348 = vector.load %arg7[%c0_61, %c0_62] : memref<1x32xf32, #tpu.memory_space<vmem>>, vector<1x32xf32>
    %349 = vector.shape_cast %348 : vector<1x32xf32> to vector<1x32xf32>
    %350 = vector.broadcast %349 : vector<1x32xf32> to vector<8x32xf32>
    %351 = arith.truncf %347 : vector<8x32xf32> to vector<8x32xbf16>
    %c0_63 = arith.constant 0 : index
    %c0_64 = arith.constant 0 : index
    %352 = vector.load %arg6[%c0_63, %c0_64] : memref<32x32xbf16, #tpu.memory_space<vmem>>, vector<32x32xbf16>
    %cst_65 = arith.constant dense<0.000000e+00> : vector<8x32xf32>
    %353 = tpu.matmul %351, %352, %cst_65 {dimension_numbers = #tpu.dot_dimension_numbers<[1], [0], [0], [1], [0, 0, 1, 1], [], []>} : vector<8x32xbf16>, vector<32x32xbf16>, vector<8x32xf32> -> vector<8x32xf32>
    %354 = arith.addf %353, %350 : vector<8x32xf32>
    %cst_66 = arith.constant 0.000000e+00 : f32
    %355 = vector.broadcast %cst_66 : f32 to vector<8x32xf32>
    %356 = tpu.concatenate %354, %327, %347, %355 in 1 : vector<8x32xf32>, vector<8x32xf32>, vector<8x32xf32>, vector<8x32xf32> -> vector<8x128xf32>
    %c0_67 = arith.constant 0 : index
    %c0_68 = arith.constant 0 : index
    %357 = vector.load %arg8[%c0_67, %c0_68] : memref<8x128xf32, #tpu.memory_space<vmem>>, vector<8x128xf32>
    tpu.vector_store %arg8[%c0_67, %c0_68], %356 {strides = array<i32>} : memref<8x128xf32, #tpu.memory_space<vmem>>, vector<8x128xf32>,
    return
  }
}

</mosaic_0001>

<llo_original>
// kernel: tpu_custom_call.1
$region0: #{tpu_custom_call.1}
  #allocation0 [shape = 'u32[]', space=smem, size = 0x4, offset = 0x4, fixed_abs, tag = 'smem constant byte address 0x4 - core index']
  #allocation1 [shape = 'u32[144,128]{1,0:T(1,128)}', space=vmem, size = 0x12000, scoped, tag = 'internal scratch']
  %s0 = inlined_call_operand.hbm [shape: f32[8,8,16], index: 0, kind: input, shape index: {}]
  %s1 = inlined_call_operand.hbm [shape: f32[2,8,32], index: 1, kind: input, shape index: {}]
  %s2 = inlined_call_operand.hbm [shape: bf16[48,128], index: 2, kind: input, shape index: {}]
  %s3 = inlined_call_operand.vmem [shape: f32[1,128], index: 3, kind: input, shape index: {}]
  %s4 = inlined_call_operand.hbm [shape: bf16[64,128], index: 4, kind: input, shape index: {}]
  %s5 = inlined_call_operand.vmem [shape: f32[1,128], index: 5, kind: input, shape index: {}]
  %s6 = inlined_call_operand.vmem [shape: bf16[32,32], index: 6, kind: input, shape index: {}]
  %s7 = inlined_call_operand.vmem [shape: f32[1,32], index: 7, kind: input, shape index: {}]
  %s8 = inlined_call_operand.hbm [shape: f32[8,128], index: 8, kind: output, shape index: {}]
  %s9 = sld [smem:[#allocation0]]
  $region58: #{tpu_custom_call.1} parent=0
    _
  %s11 = ssub.s32 1, %s9
  %s12 = scalar_select 0, %s11, %s9
  $region1: #{tpu_custom_call.1} parent=0
    #allocation2 [shape = 'u8[32768]{0}', space=vmem, size = 0x8000, scoped, tag = 'input window, operand 0, single buffered']
    #allocation3 [shape = 's32[1]{0}', space=sflag, size = 0x4, scoped, tag = 'scoped memory for tpu_custom_call.1']
    #allocation4 [shape = 's32[1]{0}', space=sflag, size = 0x4, scoped, tag = 'scoped memory for tpu_custom_call.1']
    #allocation5 [shape = 'u8[8192]{0}', space=vmem, size = 0x2000, scoped, tag = 'input window, operand 1, single buffered']
    #allocation6 [shape = 's32[1]{0}', space=sflag, size = 0x4, scoped, tag = 'scoped memory for tpu_custom_call.1']
    #allocation7 [shape = 'u8[12288]{0}', space=vmem, size = 0x3000, scoped, tag = 'input window, operand 2, single buffered']
    #allocation8 [shape = 'u8[16384]{0}', space=vmem, size = 0x4000, scoped, tag = 'input window, operand 4, single buffered']
    #allocation9 [shape = 's32[1]{0}', space=sflag, size = 0x4, scoped, tag = 'scoped memory for tpu_custom_call.1']
    #allocation10 [shape = 'u8[4096]{0}', space=vmem, size = 0x1000, scoped, tag = 'output window, operand 0, single buffered']
    %13 = vsyncpa [#allocation3], 0
    %14 = vsyncpa [#allocation6], 0
    %15 = vsyncpa [#allocation9], 0
    %16 = vsyncpa [#allocation4], 0
    // Predicated region
    $region2: #{tpu_custom_call.1} parent=1 // pred_check
      _
    $region3: #{tpu_custom_call.1} parent=1 // pred_check_branch
      %18 = sbr.rel (0) target = $region5
    $region4: #{tpu_custom_call.1} parent=1 // pred_region
      %s20 = ssub.s32 1024, 1024
      %21 = vsyncadd [#allocation3], %s20
      %s22 = sshll.u32 [#allocation2], 4
      %s23 = int_to_ptr.vmem [resolvable:$true] %s22
      %28 = dma.hbm_to_vmem [thread:$0]  %s0, 1024, %s23, [#allocation3], 128, 128, 8
    $region5: #{tpu_custom_call.1} parent=1 // pred_fallthru
      _
    // Predicated region
    $region6: #{tpu_custom_call.1} parent=1 // pred_check
      _
    $region7: #{tpu_custom_call.1} parent=1 // pred_check_branch
      %30 = sbr.rel (0) target = $region9
    $region8: #{tpu_custom_call.1} parent=1 // pred_region
      %s32 = ssub.s32 256, 256
      %33 = vsyncadd [#allocation6], %s32
      %s34 = sshll.u32 [#allocation5], 4
      %s35 = int_to_ptr.vmem [resolvable:$true] %s34
      %40 = dma.hbm_to_vmem [thread:$0]  %s1, 256, %s35, [#allocation6], 128, 128, 8
    $region9: #{tpu_custom_call.1} parent=1 // pred_fallthru
      _
    // Predicated region
    $region10: #{tpu_custom_call.1} parent=1 // pred_check
      _
    $region11: #{tpu_custom_call.1} parent=1 // pred_check_branch
      %42 = sbr.rel (0) target = $region13
    $region12: #{tpu_custom_call.1} parent=1 // pred_region
      %s44 = ssub.s32 384, 384
      %45 = vsyncadd [#allocation6], %s44
      %s46 = sshll.u32 [#allocation7], 4
      %s47 = int_to_ptr.vmem [resolvable:$true] %s46
      %52 = dma.hbm_to_vmem [thread:$0]  %s2, 384, %s47, [#allocation6], 64, 64, 4
    $region13: #{tpu_custom_call.1} parent=1 // pred_fallthru
      _
    // Predicated region
    $region14: #{tpu_custom_call.1} parent=1 // pred_check
      _
    $region15: #{tpu_custom_call.1} parent=1 // pred_check_branch
      %54 = sbr.rel (0) target = $region17
    $region16: #{tpu_custom_call.1} parent=1 // pred_region
      _
    $region17: #{tpu_custom_call.1} parent=1 // pred_fallthru
      _
    // Predicated region
    $region18: #{tpu_custom_call.1} parent=1 // pred_check
      _
    $region19: #{tpu_custom_call.1} parent=1 // pred_check_branch
      %56 = sbr.rel (0) target = $region21
    $region20: #{tpu_custom_call.1} parent=1 // pred_region
      %s58 = ssub.s32 512, 512
      %59 = vsyncadd [#allocation9], %s58
      %s60 = sshll.u32 [#allocation8], 4
      %s61 = int_to_ptr.vmem [resolvable:$true] %s60
      %66 = dma.hbm_to_vmem [thread:$0]  %s4, 512, %s61, [#allocation9], 64, 64, 4
    $region21: #{tpu_custom_call.1} parent=1 // pred_fallthru
      _
    // Predicated region
    $region22: #{tpu_custom_call.1} parent=1 // pred_check
      _
    $region23: #{tpu_custom_call.1} parent=1 // pred_check_branch
      %68 = sbr.rel (0) target = $region25
    $region24: #{tpu_custom_call.1} parent=1 // pred_region
      _
    $region25: #{tpu_custom_call.1} parent=1 // pred_fallthru
      _
    // Predicated region
    $region26: #{tpu_custom_call.1} parent=1 // pred_check
      _
    $region27: #{tpu_custom_call.1} parent=1 // pred_check_branch
      %70 = sbr.rel (0) target = $region29
    $region28: #{tpu_custom_call.1} parent=1 // pred_region
      _
    $region29: #{tpu_custom_call.1} parent=1 // pred_fallthru
      _
    // Predicated region
    $region30: #{tpu_custom_call.1} parent=1 // pred_check
      _
    $region31: #{tpu_custom_call.1} parent=1 // pred_check_branch
      %72 = sbr.rel (0) target = $region33
    $region32: #{tpu_custom_call.1} parent=1 // pred_region
      _
    $region33: #{tpu_custom_call.1} parent=1 // pred_fallthru
      _
    // Predicated region
    $region34: #{tpu_custom_call.1} parent=1 // pred_check
      _
    $region35: #{tpu_custom_call.1} parent=1 // pred_check_branch
      %74 = sbr.rel (0) target = $region37
    $region36: #{tpu_custom_call.1} parent=1 // pred_region
      %75 = dma.done [#allocation3], 1024
    $region37: #{tpu_custom_call.1} parent=1 // pred_fallthru
      _
    // Predicated region
    $region38: #{tpu_custom_call.1} parent=1 // pred_check
      _
    $region39: #{tpu_custom_call.1} parent=1 // pred_check_branch
      %77 = sbr.rel (0) target = $region41
    $region40: #{tpu_custom_call.1} parent=1 // pred_region
      %78 = dma.done [#allocation6], 256
    $region41: #{tpu_custom_call.1} parent=1 // pred_fallthru
      _
    // Predicated region
    $region42: #{tpu_custom_call.1} parent=1 // pred_check
      _
    $region43: #{tpu_custom_call.1} parent=1 // pred_check_branch
      %80 = sbr.rel (0) target = $region45
    $region44: #{tpu_custom_call.1} parent=1 // pred_region
      %81 = dma.done [#allocation6], 384
    $region45: #{tpu_custom_call.1} parent=1 // pred_fallthru
      _
    // Predicated region
    $region46: #{tpu_custom_call.1} parent=1 // pred_check
      _
    $region47: #{tpu_custom_call.1} parent=1 // pred_check_branch
      %83 = sbr.rel (0) target = $region49
    $region48: #{tpu_custom_call.1} parent=1 // pred_region
      %84 = dma.done [#allocation9], 512
    $region49: #{tpu_custom_call.1} parent=1 // pred_fallthru
      _
    %v86 = vld [vmem:[#allocation7] sm:$0xf]
    %v87 = vld [vmem:[#allocation7 + $0x4] sm:$0xf]
    %v88 = vld [vmem:[#allocation7 + $0x8] sm:$0xf]
    %v89 = vld [vmem:[#allocation7 + $0xc] sm:$0xf]
    %v90 = vld [vmem:[#allocation7 + $0x10] sm:$0xf]
    %v91 = vld [vmem:[#allocation7 + $0x14] sm:$0xf]
    %v92 = vld [vmem:[#allocation8] sm:$0xf]
    %v93 = vld [vmem:[#allocation8 + $0x4] sm:$0xf]
    %v94 = vld [vmem:[#allocation8 + $0x8] sm:$0xf]
    %v95 = vld [vmem:[#allocation8 + $0xc] sm:$0xf]
    %v96 = vld [vmem:[#allocation8 + $0x10] sm:$0xf]
    %v97 = vld [vmem:[#allocation8 + $0x14] sm:$0xf]
    %v98 = vld [vmem:[#allocation8 + $0x18] sm:$0xf]
    %v99 = vld [vmem:[#allocation8 + $0x1c] sm:$0xf]
    %v100 = vld [vmem:[%s3] sm:$0x1]
    %v102 = vlaneseq
    %v103 = vshrl.u32 %v102, 7
    %v104 = vsub.s32 0, %v103
    %v105 = vrot.slane %v100, %v104
    %v107 = vld [vmem:[%s5] sm:$0x1]
    %v109 = vlaneseq
    %v110 = vshrl.u32 %v109, 7
    %v111 = vsub.s32 0, %v110
    %v112 = vrot.slane %v107, %v111
    %v114 = vld [vmem:[#allocation5] sm:$0xff]
    %s115 = scalar_lea.vmem [#allocation5], 8
    %v116 = vld [vmem:[%s115] sm:$0xff]
    %v117 = vld [vmem:[#allocation2] sm:$0xff]
    %119 = vrot.lane.b32.xlu0 %v114, 16
    %v120 = vpop.permute.xlu0 %119
    %vm122 = vcmask 130048
    %v123 = vsel %vm122, %v117, %v120
    %v124 = vpack.c.bf16 %v123, %v123
    %v131 = vunpack.c.l.b16 %v86
    %v132 = vunpack.c.l.b16 %v87
    %v133 = vunpack.c.l.b16 %v88
    %v134 = vunpack.c.l.b16 %v89
    %v135 = vunpack.c.l.b16 %v90
    %v136 = vunpack.c.l.b16 %v91
    %v137 = vpack.c.b16 %v132, %v131
    %v138 = vpack.c.b16 %v134, %v133
    %v139 = vpack.c.b16 %v136, %v135
    %vm143 = vcmask 392192
    %v145 = vsel %vm143, %v124, 0
    %147 = vmatprep.subr.bf16.mxu0 0
    %148 = vmatpush1.bf16.msra.mxu0 %v137
    %149 = vmatprep.subr.bf16.mxu0 0
    %150 = vmatpush1.bf16.msra.mxu0 %v138
    %151 = vmatprep.subr.bf16.mxu0 0
    %152 = vmatpush1.bf16.msra.mxu0 %v139
    %153 = vmatprep.subr.bf16.mxu0 0
    %154 = vmatpush1.bf16.msra.mxu0 0
    %155 = vmatprep.subr.bf16.mxu0 0
    %156 = vmatpush1.bf16.msra.mxu0 0
    %157 = vmatprep.subr.bf16.mxu0 0
    %158 = vmatpush1.bf16.msra.mxu0 0
    %159 = vmatprep.subr.bf16.mxu0 0
    %160 = vmatpush1.bf16.msra.mxu0 0
    %161 = vmatprep.subr.bf16.mxu0 0
    %162 = vmatpush1.bf16.msra.mxu0 0
    %163 = vmatprep.subr.bf16.mxu0 0
    %164 = vmatpush1.bf16.msra.mxu0 0
    %165 = vmatprep.subr.bf16.mxu0 0
    %166 = vmatpush1.bf16.msra.mxu0 0
    %167 = vmatprep.subr.bf16.mxu0 0
    %168 = vmatpush1.bf16.msra.mxu0 0
    %169 = vmatprep.subr.bf16.mxu0 0
    %170 = vmatpush1.bf16.msra.mxu0 0
    %171 = vmatprep.subr.bf16.mxu0 0
    %172 = vmatpush1.bf16.msra.mxu0 0
    %173 = vmatprep.subr.bf16.mxu0 0
    %174 = vmatpush1.bf16.msra.mxu0 0
    %175 = vmatprep.subr.bf16.mxu0 0
    %176 = vmatpush1.bf16.msra.mxu0 0
    %177 = vmatprep.subr.bf16.mxu0 0
    %178 = vmatpush1.bf16.msra.mxu0 0
    %179 = vmatprep.mubr.bf16.mxu0 0
    %180 = vmatmul.mubr.bf16.gmra.mrb[0].mxu0 %v145
    %v181 = vpop.f32.mrb[0].mxu0
    %v182 = vadd.f32 %v105, %v181
    %v183 = vpop.f32.mrb[0].mxu0
    %v184 = vpop.f32.mrb[0].mxu0
    %v185 = vpop.f32.mrb[0].mxu0
    %186 = vdwg.mxu0
    %v187 = vxor.u32 %v182, 2147483648
    %v188 = vmul.f32 %v187, 1.442695
    %v189 = vpow.pop %v188
    %v190 = vadd.f32 %v189, 1.0
    %v191 = vrcp.pop %v190
    %v192 = vmul.f32 1.0, %v191
    %194 = vrot.lane.b32.xlu0 %v182, 32
    %v195 = vpop.permute.xlu0 %194
    %v197 = vmul.f32 %v192, %v195
    %199 = vrot.lane.b32.xlu0 %v197, 64
    %v200 = vpop.permute.xlu0 %199
    %v202 = vadd.f32 %v182, %v200
    %v203 = vtanh.pop %v202
    %205 = vrot.lane.b32.xlu0 %v203, 64
    %v206 = vpop.permute.xlu0 %205
    %v208 = vsub.f32 %v114, %v206
    %210 = vrot.lane.b32.xlu0 %v208, 32
    %v211 = vpop.permute.xlu0 %210
    %v213 = vmul.f32 %v192, %v211
    %215 = vrot.lane.b32.xlu0 %v213, 32
    %v216 = vpop.permute.xlu0 %215
    %v218 = vadd.f32 %v203, %v216
    %220 = vrot.lane.b32.xlu0 %v218, 64
    %v221 = vpop.permute.xlu0 %220
    %224 = vrot.lane.b32.xlu0 %v116, 32
    %v225 = vpop.permute.xlu0 %224
    %vm227 = vcmask 261120
    %v228 = vsel %vm227, %v221, %v225
    %v229 = vpack.c.bf16 %v228, %v228
    %v238 = vunpack.c.l.b16 %v92
    %v239 = vunpack.c.l.b16 %v93
    %v240 = vunpack.c.l.b16 %v94
    %v241 = vunpack.c.l.b16 %v95
    %v242 = vunpack.c.l.b16 %v96
    %v243 = vunpack.c.l.b16 %v97
    %v244 = vunpack.c.l.b16 %v98
    %v245 = vunpack.c.l.b16 %v99
    %v246 = vpack.c.b16 %v239, %v238
    %v247 = vpack.c.b16 %v241, %v240
    %v248 = vpack.c.b16 %v243, %v242
    %v249 = vpack.c.b16 %v245, %v244
    %vm254 = vcmask 523264
    %v256 = vsel %vm254, %v229, 0
    %258 = vmatprep.subr.bf16.mxu0 0
    %259 = vmatpush1.bf16.msra.mxu0 %v246
    %260 = vmatprep.subr.bf16.mxu0 0
    %261 = vmatpush1.bf16.msra.mxu0 %v247
    %262 = vmatprep.subr.bf16.mxu0 0
    %263 = vmatpush1.bf16.msra.mxu0 %v248
    %264 = vmatprep.subr.bf16.mxu0 0
    %265 = vmatpush1.bf16.msra.mxu0 %v249
    %266 = vmatprep.subr.bf16.mxu0 0
    %267 = vmatpush1.bf16.msra.mxu0 0
    %268 = vmatprep.subr.bf16.mxu0 0
    %269 = vmatpush1.bf16.msra.mxu0 0
    %270 = vmatprep.subr.bf16.mxu0 0
    %271 = vmatpush1.bf16.msra.mxu0 0
    %272 = vmatprep.subr.bf16.mxu0 0
    %273 = vmatpush1.bf16.msra.mxu0 0
    %274 = vmatprep.subr.bf16.mxu0 0
    %275 = vmatpush1.bf16.msra.mxu0 0
    %276 = vmatprep.subr.bf16.mxu0 0
    %277 = vmatpush1.bf16.msra.mxu0 0
    %278 = vmatprep.subr.bf16.mxu0 0
    %279 = vmatpush1.bf16.msra.mxu0 0
    %280 = vmatprep.subr.bf16.mxu0 0
    %281 = vmatpush1.bf16.msra.mxu0 0
    %282 = vmatprep.subr.bf16.mxu0 0
    %283 = vmatpush1.bf16.msra.mxu0 0
    %284 = vmatprep.subr.bf16.mxu0 0
    %285 = vmatpush1.bf16.msra.mxu0 0
    %286 = vmatprep.subr.bf16.mxu0 0
    %287 = vmatpush1.bf16.msra.mxu0 0
    %288 = vmatprep.subr.bf16.mxu0 0
    %289 = vmatpush1.bf16.msra.mxu0 0
    %290 = vmatprep.mubr.bf16.mxu0 0
    %291 = vmatmul.mubr.bf16.gmra.mrb[0].mxu0 %v256
    %v292 = vpop.f32.mrb[0].mxu0
    %v293 = vadd.f32 %v112, %v292
    %v294 = vpop.f32.mrb[0].mxu0
    %v295 = vpop.f32.mrb[0].mxu0
    %v296 = vpop.f32.mrb[0].mxu0
    %297 = vdwg.mxu0
    %v298 = vxor.u32 %v293, 2147483648
    %v299 = vmul.f32 %v298, 1.442695
    %v300 = vpow.pop %v299
    %v301 = vadd.f32 %v300, 1.0
    %v302 = vrcp.pop %v301
    %v303 = vmul.f32 1.0, %v302
    %305 = vrot.lane.b32.xlu0 %v293, 32
    %v306 = vpop.permute.xlu0 %305
    %v308 = vmul.f32 %v303, %v306
    %310 = vrot.lane.b32.xlu0 %v308, 64
    %v311 = vpop.permute.xlu0 %310
    %v313 = vadd.f32 %v293, %v311
    %v314 = vtanh.pop %v313
    %316 = vrot.lane.b32.xlu0 %v314, 64
    %v317 = vpop.permute.xlu0 %316
    %v319 = vsub.f32 %v116, %v317
    %321 = vrot.lane.b32.xlu0 %v319, 32
    %v322 = vpop.permute.xlu0 %321
    %v324 = vmul.f32 %v303, %v322
    %326 = vrot.lane.b32.xlu0 %v324, 32
    %v327 = vpop.permute.xlu0 %326
    %v329 = vadd.f32 %v314, %v327
    %s330 = scalar_lea.vmem [#allocation2], 8
    %v331 = vld [vmem:[%s330] sm:$0xff]
    %332 = vrot.lane.b32.xlu0 %v218, 80
    %v333 = vpop.permute.xlu0 %332
    %v335 = vsel %vm122, %v331, %v333
    %v336 = vpack.c.bf16 %v335, %v335
    %v338 = vsel %vm143, %v336, 0
    %340 = vmatprep.subr.bf16.mxu0 0
    %341 = vmatpush1.bf16.msra.mxu0 %v137
    %342 = vmatprep.subr.bf16.mxu0 0
    %343 = vmatpush1.bf16.msra.mxu0 %v138
    %344 = vmatprep.subr.bf16.mxu0 0
    %345 = vmatpush1.bf16.msra.mxu0 %v139
    %346 = vmatprep.subr.bf16.mxu0 0
    %347 = vmatpush1.bf16.msra.mxu0 0
    %348 = vmatprep.subr.bf16.mxu0 0
    %349 = vmatpush1.bf16.msra.mxu0 0
    %350 = vmatprep.subr.bf16.mxu0 0
    %351 = vmatpush1.bf16.msra.mxu0 0
    %352 = vmatprep.subr.bf16.mxu0 0
    %353 = vmatpush1.bf16.msra.mxu0 0
    %354 = vmatprep.subr.bf16.mxu0 0
    %355 = vmatpush1.bf16.msra.mxu0 0
    %356 = vmatprep.subr.bf16.mxu0 0
    %357 = vmatpush1.bf16.msra.mxu0 0
    %358 = vmatprep.subr.bf16.mxu0 0
    %359 = vmatpush1.bf16.msra.mxu0 0
    %360 = vmatprep.subr.bf16.mxu0 0
    %361 = vmatpush1.bf16.msra.mxu0 0
    %362 = vmatprep.subr.bf16.mxu0 0
    %363 = vmatpush1.bf16.msra.mxu0 0
    %364 = vmatprep.subr.bf16.mxu0 0
    %365 = vmatpush1.bf16.msra.mxu0 0
    %366 = vmatprep.subr.bf16.mxu0 0
    %367 = vmatpush1.bf16.msra.mxu0 0
    %368 = vmatprep.subr.bf16.mxu0 0
    %369 = vmatpush1.bf16.msra.mxu0 0
    %370 = vmatprep.subr.bf16.mxu0 0
    %371 = vmatpush1.bf16.msra.mxu0 0
    %372 = vmatprep.mubr.bf16.mxu0 0
    %373 = vmatmul.mubr.bf16.gmra.mrb[0].mxu0 %v338
    %v374 = vpop.f32.mrb[0].mxu0
    %v375 = vadd.f32 %v105, %v374
    %v376 = vpop.f32.mrb[0].mxu0
    %v377 = vpop.f32.mrb[0].mxu0
    %v378 = vpop.f32.mrb[0].mxu0
    %379 = vdwg.mxu0
    %v380 = vxor.u32 %v375, 2147483648
    %v381 = vmul.f32 %v380, 1.442695
    %v382 = vpow.pop %v381
    %v383 = vadd.f32 %v382, 1.0
    %v384 = vrcp.pop %v383
    %v385 = vmul.f32 1.0, %v384
    %387 = vrot.lane.b32.xlu0 %v375, 32
    %v388 = vpop.permute.xlu0 %387
    %v390 = vmul.f32 %v385, %v388
    %392 = vrot.lane.b32.xlu0 %v390, 64
    %v393 = vpop.permute.xlu0 %392
    %v395 = vadd.f32 %v375, %v393
    %v396 = vtanh.pop %v395
    %v397 = vsub.f32 %v218, %v396
    %399 = vrot.lane.b32.xlu0 %v397, 96
    %v400 = vpop.permute.xlu0 %399
    %v402 = vmul.f32 %v385, %v400
    %404 = vrot.lane.b32.xlu0 %v402, 32
    %v405 = vpop.permute.xlu0 %404
    %v407 = vadd.f32 %v396, %v405
    %409 = vrot.lane.b32.xlu0 %v407, 64
    %v410 = vpop.permute.xlu0 %409
    %413 = vrot.lane.b32.xlu0 %v329, 96
    %v414 = vpop.permute.xlu0 %413
    %v416 = vsel %vm227, %v410, %v414
    %v417 = vpack.c.bf16 %v416, %v416
    %v419 = vsel %vm254, %v417, 0
    %421 = vmatprep.subr.bf16.mxu0 0
    %422 = vmatpush1.bf16.msra.mxu0 %v246
    %423 = vmatprep.subr.bf16.mxu0 0
    %424 = vmatpush1.bf16.msra.mxu0 %v247
    %425 = vmatprep.subr.bf16.mxu0 0
    %426 = vmatpush1.bf16.msra.mxu0 %v248
    %427 = vmatprep.subr.bf16.mxu0 0
    %428 = vmatpush1.bf16.msra.mxu0 %v249
    %429 = vmatprep.subr.bf16.mxu0 0
    %430 = vmatpush1.bf16.msra.mxu0 0
    %431 = vmatprep.subr.bf16.mxu0 0
    %432 = vmatpush1.bf16.msra.mxu0 0
    %433 = vmatprep.subr.bf16.mxu0 0
    %434 = vmatpush1.bf16.msra.mxu0 0
    %435 = vmatprep.subr.bf16.mxu0 0
    %436 = vmatpush1.bf16.msra.mxu0 0
    %437 = vmatprep.subr.bf16.mxu0 0
    %438 = vmatpush1.bf16.msra.mxu0 0
    %439 = vmatprep.subr.bf16.mxu0 0
    %440 = vmatpush1.bf16.msra.mxu0 0
    %441 = vmatprep.subr.bf16.mxu0 0
    %442 = vmatpush1.bf16.msra.mxu0 0
    %443 = vmatprep.subr.bf16.mxu0 0
    %444 = vmatpush1.bf16.msra.mxu0 0
    %445 = vmatprep.subr.bf16.mxu0 0
    %446 = vmatpush1.bf16.msra.mxu0 0
    %447 = vmatprep.subr.bf16.mxu0 0
    %448 = vmatpush1.bf16.msra.mxu0 0
    %449 = vmatprep.subr.bf16.mxu0 0
    %450 = vmatpush1.bf16.msra.mxu0 0
    %451 = vmatprep.subr.bf16.mxu0 0
    %452 = vmatpush1.bf16.msra.mxu0 0
    %453 = vmatprep.mubr.bf16.mxu0 0
    %454 = vmatmul.mubr.bf16.gmra.mrb[0].mxu0 %v419
    %v455 = vpop.f32.mrb[0].mxu0
    %v456 = vadd.f32 %v112, %v455
    %v457 = vpop.f32.mrb[0].mxu0
    %v458 = vpop.f32.mrb[0].mxu0
    %v459 = vpop.f32.mrb[0].mxu0
    %460 = vdwg.mxu0
    %v461 = vxor.u32 %v456, 2147483648
    %v462 = vmul.f32 %v461, 1.442695
    %v463 = vpow.pop %v462
    %v464 = vadd.f32 %v463, 1.0
    %v465 = vrcp.pop %v464
    %v466 = vmul.f32 1.0, %v465
    %468 = vrot.lane.b32.xlu0 %v456, 32
    %v469 = vpop.permute.xlu0 %468
    %v471 = vmul.f32 %v466, %v469
    %473 = vrot.lane.b32.xlu0 %v471, 64
    %v474 = vpop.permute.xlu0 %473
    %v476 = vadd.f32 %v456, %v474
    %v477 = vtanh.pop %v476
    %v478 = vsub.f32 %v329, %v477
    %480 = vrot.lane.b32.xlu0 %v478, 96
    %v481 = vpop.permute.xlu0 %480
    %v483 = vmul.f32 %v466, %v481
    %485 = vrot.lane.b32.xlu0 %v483, 32
    %v486 = vpop.permute.xlu0 %485
    %v488 = vadd.f32 %v477, %v486
    %s489 = scalar_lea.vmem [#allocation2], 16
    %v490 = vld [vmem:[%s489] sm:$0xff]
    %491 = vrot.lane.b32.xlu0 %v407, 80
    %v492 = vpop.permute.xlu0 %491
    %v494 = vsel %vm122, %v490, %v492
    %v495 = vpack.c.bf16 %v494, %v494
    %v497 = vsel %vm143, %v495, 0
    %499 = vmatprep.subr.bf16.mxu0 0
    %500 = vmatpush1.bf16.msra.mxu0 %v137
    %501 = vmatprep.subr.bf16.mxu0 0
    %502 = vmatpush1.bf16.msra.mxu0 %v138
    %503 = vmatprep.subr.bf16.mxu0 0
    %504 = vmatpush1.bf16.msra.mxu0 %v139
    %505 = vmatprep.subr.bf16.mxu0 0
    %506 = vmatpush1.bf16.msra.mxu0 0
    %507 = vmatprep.subr.bf16.mxu0 0
    %508 = vmatpush1.bf16.msra.mxu0 0
    %509 = vmatprep.subr.bf16.mxu0 0
    %510 = vmatpush1.bf16.msra.mxu0 0
    %511 = vmatprep.subr.bf16.mxu0 0
    %512 = vmatpush1.bf16.msra.mxu0 0
    %513 = vmatprep.subr.bf16.mxu0 0
    %514 = vmatpush1.bf16.msra.mxu0 0
    %515 = vmatprep.subr.bf16.mxu0 0
    %516 = vmatpush1.bf16.msra.mxu0 0
    %517 = vmatprep.subr.bf16.mxu0 0
    %518 = vmatpush1.bf16.msra.mxu0 0
    %519 = vmatprep.subr.bf16.mxu0 0
    %520 = vmatpush1.bf16.msra.mxu0 0
    %521 = vmatprep.subr.bf16.mxu0 0
    %522 = vmatpush1.bf16.msra.mxu0 0
    %523 = vmatprep.subr.bf16.mxu0 0
    %524 = vmatpush1.bf16.msra.mxu0 0
    %525 = vmatprep.subr.bf16.mxu0 0
    %526 = vmatpush1.bf16.msra.mxu0 0
    %527 = vmatprep.subr.bf16.mxu0 0
    %528 = vmatpush1.bf16.msra.mxu0 0
    %529 = vmatprep.subr.bf16.mxu0 0
    %530 = vmatpush1.bf16.msra.mxu0 0
    %531 = vmatprep.mubr.bf16.mxu0 0
    %532 = vmatmul.mubr.bf16.gmra.mrb[0].mxu0 %v497
    %v533 = vpop.f32.mrb[0].mxu0
    %v534 = vadd.f32 %v105, %v533
    %v535 = vpop.f32.mrb[0].mxu0
    %v536 = vpop.f32.mrb[0].mxu0
    %v537 = vpop.f32.mrb[0].mxu0
    %538 = vdwg.mxu0
    %v539 = vxor.u32 %v534, 2147483648
    %v540 = vmul.f32 %v539, 1.442695
    %v541 = vpow.pop %v540
    %v542 = vadd.f32 %v541, 1.0
    %v543 = vrcp.pop %v542
    %v544 = vmul.f32 1.0, %v543
    %546 = vrot.lane.b32.xlu0 %v534, 32
    %v547 = vpop.permute.xlu0 %546
    %v549 = vmul.f32 %v544, %v547
    %551 = vrot.lane.b32.xlu0 %v549, 64
    %v552 = vpop.permute.xlu0 %551
    %v554 = vadd.f32 %v534, %v552
    %v555 = vtanh.pop %v554
    %v556 = vsub.f32 %v407, %v555
    %558 = vrot.lane.b32.xlu0 %v556, 96
    %v559 = vpop.permute.xlu0 %558
    %v561 = vmul.f32 %v544, %v559
    %563 = vrot.lane.b32.xlu0 %v561, 32
    %v564 = vpop.permute.xlu0 %563
    %v566 = vadd.f32 %v555, %v564
    %568 = vrot.lane.b32.xlu0 %v566, 64
    %v569 = vpop.permute.xlu0 %568
    %572 = vrot.lane.b32.xlu0 %v488, 96
    %v573 = vpop.permute.xlu0 %572
    %v575 = vsel %vm227, %v569, %v573
    %v576 = vpack.c.bf16 %v575, %v575
    %v578 = vsel %vm254, %v576, 0
    %580 = vmatprep.subr.bf16.mxu0 0
    %581 = vmatpush1.bf16.msra.mxu0 %v246
    %582 = vmatprep.subr.bf16.mxu0 0
    %583 = vmatpush1.bf16.msra.mxu0 %v247
    %584 = vmatprep.subr.bf16.mxu0 0
    %585 = vmatpush1.bf16.msra.mxu0 %v248
    %586 = vmatprep.subr.bf16.mxu0 0
    %587 = vmatpush1.bf16.msra.mxu0 %v249
    %588 = vmatprep.subr.bf16.mxu0 0
    %589 = vmatpush1.bf16.msra.mxu0 0
    %590 = vmatprep.subr.bf16.mxu0 0
    %591 = vmatpush1.bf16.msra.mxu0 0
    %592 = vmatprep.subr.bf16.mxu0 0
    %593 = vmatpush1.bf16.msra.mxu0 0
    %594 = vmatprep.subr.bf16.mxu0 0
    %595 = vmatpush1.bf16.msra.mxu0 0
    %596 = vmatprep.subr.bf16.mxu0 0
    %597 = vmatpush1.bf16.msra.mxu0 0
    %598 = vmatprep.subr.bf16.mxu0 0
    %599 = vmatpush1.bf16.msra.mxu0 0
    %600 = vmatprep.subr.bf16.mxu0 0
    %601 = vmatpush1.bf16.msra.mxu0 0
    %602 = vmatprep.subr.bf16.mxu0 0
    %603 = vmatpush1.bf16.msra.mxu0 0
    %604 = vmatprep.subr.bf16.mxu0 0
    %605 = vmatpush1.bf16.msra.mxu0 0
    %606 = vmatprep.subr.bf16.mxu0 0
    %607 = vmatpush1.bf16.msra.mxu0 0
    %608 = vmatprep.subr.bf16.mxu0 0
    %609 = vmatpush1.bf16.msra.mxu0 0
    %610 = vmatprep.subr.bf16.mxu0 0
    %611 = vmatpush1.bf16.msra.mxu0 0
    %612 = vmatprep.mubr.bf16.mxu0 0
    %613 = vmatmul.mubr.bf16.gmra.mrb[0].mxu0 %v578
    %v614 = vpop.f32.mrb[0].mxu0
    %v615 = vadd.f32 %v112, %v614
    %v616 = vpop.f32.mrb[0].mxu0
    %v617 = vpop.f32.mrb[0].mxu0
    %v618 = vpop.f32.mrb[0].mxu0
    %619 = vdwg.mxu0
    %v620 = vxor.u32 %v615, 2147483648
    %v621 = vmul.f32 %v620, 1.442695
    %v622 = vpow.pop %v621
    %v623 = vadd.f32 %v622, 1.0
    %v624 = vrcp.pop %v623
    %v625 = vmul.f32 1.0, %v624
    %627 = vrot.lane.b32.xlu0 %v615, 32
    %v628 = vpop.permute.xlu0 %627
    %v630 = vmul.f32 %v625, %v628
    %632 = vrot.lane.b32.xlu0 %v630, 64
    %v633 = vpop.permute.xlu0 %632
    %v635 = vadd.f32 %v615, %v633
    %v636 = vtanh.pop %v635
    %v637 = vsub.f32 %v488, %v636
    %639 = vrot.lane.b32.xlu0 %v637, 96
    %v640 = vpop.permute.xlu0 %639
    %v642 = vmul.f32 %v625, %v640
    %644 = vrot.lane.b32.xlu0 %v642, 32
    %v645 = vpop.permute.xlu0 %644
    %v647 = vadd.f32 %v636, %v645
    %s648 = scalar_lea.vmem [#allocation2], 24
    %v649 = vld [vmem:[%s648] sm:$0xff]
    %650 = vrot.lane.b32.xlu0 %v566, 80
    %v651 = vpop.permute.xlu0 %650
    %v653 = vsel %vm122, %v649, %v651
    %v654 = vpack.c.bf16 %v653, %v653
    %v656 = vsel %vm143, %v654, 0
    %658 = vmatprep.subr.bf16.mxu0 0
    %659 = vmatpush1.bf16.msra.mxu0 %v137
    %660 = vmatprep.subr.bf16.mxu0 0
    %661 = vmatpush1.bf16.msra.mxu0 %v138
    %662 = vmatprep.subr.bf16.mxu0 0
    %663 = vmatpush1.bf16.msra.mxu0 %v139
    %664 = vmatprep.subr.bf16.mxu0 0
    %665 = vmatpush1.bf16.msra.mxu0 0
    %666 = vmatprep.subr.bf16.mxu0 0
    %667 = vmatpush1.bf16.msra.mxu0 0
    %668 = vmatprep.subr.bf16.mxu0 0
    %669 = vmatpush1.bf16.msra.mxu0 0
    %670 = vmatprep.subr.bf16.mxu0 0
    %671 = vmatpush1.bf16.msra.mxu0 0
    %672 = vmatprep.subr.bf16.mxu0 0
    %673 = vmatpush1.bf16.msra.mxu0 0
    %674 = vmatprep.subr.bf16.mxu0 0
    %675 = vmatpush1.bf16.msra.mxu0 0
    %676 = vmatprep.subr.bf16.mxu0 0
    %677 = vmatpush1.bf16.msra.mxu0 0
    %678 = vmatprep.subr.bf16.mxu0 0
    %679 = vmatpush1.bf16.msra.mxu0 0
    %680 = vmatprep.subr.bf16.mxu0 0
    %681 = vmatpush1.bf16.msra.mxu0 0
    %682 = vmatprep.subr.bf16.mxu0 0
    %683 = vmatpush1.bf16.msra.mxu0 0
    %684 = vmatprep.subr.bf16.mxu0 0
    %685 = vmatpush1.bf16.msra.mxu0 0
    %686 = vmatprep.subr.bf16.mxu0 0
    %687 = vmatpush1.bf16.msra.mxu0 0
    %688 = vmatprep.subr.bf16.mxu0 0
    %689 = vmatpush1.bf16.msra.mxu0 0
    %690 = vmatprep.mubr.bf16.mxu0 0
    %691 = vmatmul.mubr.bf16.gmra.mrb[0].mxu0 %v656
    %v692 = vpop.f32.mrb[0].mxu0
    %v693 = vadd.f32 %v105, %v692
    %v694 = vpop.f32.mrb[0].mxu0
    %v695 = vpop.f32.mrb[0].mxu0
    %v696 = vpop.f32.mrb[0].mxu0
    %697 = vdwg.mxu0
    %v698 = vxor.u32 %v693, 2147483648
    %v699 = vmul.f32 %v698, 1.442695
    %v700 = vpow.pop %v699
    %v701 = vadd.f32 %v700, 1.0
    %v702 = vrcp.pop %v701
    %v703 = vmul.f32 1.0, %v702
    %705 = vrot.lane.b32.xlu0 %v693, 32
    %v706 = vpop.permute.xlu0 %705
    %v708 = vmul.f32 %v703, %v706
    %710 = vrot.lane.b32.xlu0 %v708, 64
    %v711 = vpop.permute.xlu0 %710
    %v713 = vadd.f32 %v693, %v711
    %v714 = vtanh.pop %v713
    %v715 = vsub.f32 %v566, %v714
    %717 = vrot.lane.b32.xlu0 %v715, 96
    %v718 = vpop.permute.xlu0 %717
    %v720 = vmul.f32 %v703, %v718
    %722 = vrot.lane.b32.xlu0 %v720, 32
    %v723 = vpop.permute.xlu0 %722
    %v725 = vadd.f32 %v714, %v723
    %727 = vrot.lane.b32.xlu0 %v725, 64
    %v728 = vpop.permute.xlu0 %727
    %731 = vrot.lane.b32.xlu0 %v647, 96
    %v732 = vpop.permute.xlu0 %731
    %v734 = vsel %vm227, %v728, %v732
    %v735 = vpack.c.bf16 %v734, %v734
    %v737 = vsel %vm254, %v735, 0
    %739 = vmatprep.subr.bf16.mxu0 0
    %740 = vmatpush1.bf16.msra.mxu0 %v246
    %741 = vmatprep.subr.bf16.mxu0 0
    %742 = vmatpush1.bf16.msra.mxu0 %v247
    %743 = vmatprep.subr.bf16.mxu0 0
    %744 = vmatpush1.bf16.msra.mxu0 %v248
    %745 = vmatprep.subr.bf16.mxu0 0
    %746 = vmatpush1.bf16.msra.mxu0 %v249
    %747 = vmatprep.subr.bf16.mxu0 0
    %748 = vmatpush1.bf16.msra.mxu0 0
    %749 = vmatprep.subr.bf16.mxu0 0
    %750 = vmatpush1.bf16.msra.mxu0 0
    %751 = vmatprep.subr.bf16.mxu0 0
    %752 = vmatpush1.bf16.msra.mxu0 0
    %753 = vmatprep.subr.bf16.mxu0 0
    %754 = vmatpush1.bf16.msra.mxu0 0
    %755 = vmatprep.subr.bf16.mxu0 0
    %756 = vmatpush1.bf16.msra.mxu0 0
    %757 = vmatprep.subr.bf16.mxu0 0
    %758 = vmatpush1.bf16.msra.mxu0 0
    %759 = vmatprep.subr.bf16.mxu0 0
    %760 = vmatpush1.bf16.msra.mxu0 0
    %761 = vmatprep.subr.bf16.mxu0 0
    %762 = vmatpush1.bf16.msra.mxu0 0
    %763 = vmatprep.subr.bf16.mxu0 0
    %764 = vmatpush1.bf16.msra.mxu0 0
    %765 = vmatprep.subr.bf16.mxu0 0
    %766 = vmatpush1.bf16.msra.mxu0 0
    %767 = vmatprep.subr.bf16.mxu0 0
    %768 = vmatpush1.bf16.msra.mxu0 0
    %769 = vmatprep.subr.bf16.mxu0 0
    %770 = vmatpush1.bf16.msra.mxu0 0
    %771 = vmatprep.mubr.bf16.mxu0 0
    %772 = vmatmul.mubr.bf16.gmra.mrb[0].mxu0 %v737
    %v773 = vpop.f32.mrb[0].mxu0
    %v774 = vadd.f32 %v112, %v773
    %v775 = vpop.f32.mrb[0].mxu0
    %v776 = vpop.f32.mrb[0].mxu0
    %v777 = vpop.f32.mrb[0].mxu0
    %778 = vdwg.mxu0
    %v779 = vxor.u32 %v774, 2147483648
    %v780 = vmul.f32 %v779, 1.442695
    %v781 = vpow.pop %v780
    %v782 = vadd.f32 %v781, 1.0
    %v783 = vrcp.pop %v782
    %v784 = vmul.f32 1.0, %v783
    %786 = vrot.lane.b32.xlu0 %v774, 32
    %v787 = vpop.permute.xlu0 %786
    %v789 = vmul.f32 %v784, %v787
    %791 = vrot.lane.b32.xlu0 %v789, 64
    %v792 = vpop.permute.xlu0 %791
    %v794 = vadd.f32 %v774, %v792
    %v795 = vtanh.pop %v794
    %v796 = vsub.f32 %v647, %v795
    %798 = vrot.lane.b32.xlu0 %v796, 96
    %v799 = vpop.permute.xlu0 %798
    %v801 = vmul.f32 %v784, %v799
    %803 = vrot.lane.b32.xlu0 %v801, 32
    %v804 = vpop.permute.xlu0 %803
    %v806 = vadd.f32 %v795, %v804
    %s807 = scalar_lea.vmem [#allocation2], 32
    %v808 = vld [vmem:[%s807] sm:$0xff]
    %809 = vrot.lane.b32.xlu0 %v725, 80
    %v810 = vpop.permute.xlu0 %809
    %v812 = vsel %vm122, %v808, %v810
    %v813 = vpack.c.bf16 %v812, %v812
    %v815 = vsel %vm143, %v813, 0
    %817 = vmatprep.subr.bf16.mxu0 0
    %818 = vmatpush1.bf16.msra.mxu0 %v137
    %819 = vmatprep.subr.bf16.mxu0 0
    %820 = vmatpush1.bf16.msra.mxu0 %v138
    %821 = vmatprep.subr.bf16.mxu0 0
    %822 = vmatpush1.bf16.msra.mxu0 %v139
    %823 = vmatprep.subr.bf16.mxu0 0
    %824 = vmatpush1.bf16.msra.mxu0 0
    %825 = vmatprep.subr.bf16.mxu0 0
    %826 = vmatpush1.bf16.msra.mxu0 0
    %827 = vmatprep.subr.bf16.mxu0 0
    %828 = vmatpush1.bf16.msra.mxu0 0
    %829 = vmatprep.subr.bf16.mxu0 0
    %830 = vmatpush1.bf16.msra.mxu0 0
    %831 = vmatprep.subr.bf16.mxu0 0
    %832 = vmatpush1.bf16.msra.mxu0 0
    %833 = vmatprep.subr.bf16.mxu0 0
    %834 = vmatpush1.bf16.msra.mxu0 0
    %835 = vmatprep.subr.bf16.mxu0 0
    %836 = vmatpush1.bf16.msra.mxu0 0
    %837 = vmatprep.subr.bf16.mxu0 0
    %838 = vmatpush1.bf16.msra.mxu0 0
    %839 = vmatprep.subr.bf16.mxu0 0
    %840 = vmatpush1.bf16.msra.mxu0 0
    %841 = vmatprep.subr.bf16.mxu0 0
    %842 = vmatpush1.bf16.msra.mxu0 0
    %843 = vmatprep.subr.bf16.mxu0 0
    %844 = vmatpush1.bf16.msra.mxu0 0
    %845 = vmatprep.subr.bf16.mxu0 0
    %846 = vmatpush1.bf16.msra.mxu0 0
    %847 = vmatprep.subr.bf16.mxu0 0
    %848 = vmatpush1.bf16.msra.mxu0 0
    %849 = vmatprep.mubr.bf16.mxu0 0
    %850 = vmatmul.mubr.bf16.gmra.mrb[0].mxu0 %v815
    %v851 = vpop.f32.mrb[0].mxu0
    %v852 = vadd.f32 %v105, %v851
    %v853 = vpop.f32.mrb[0].mxu0
    %v854 = vpop.f32.mrb[0].mxu0
    %v855 = vpop.f32.mrb[0].mxu0
    %856 = vdwg.mxu0
    %v857 = vxor.u32 %v852, 2147483648
    %v858 = vmul.f32 %v857, 1.442695
    %v859 = vpow.pop %v858
    %v860 = vadd.f32 %v859, 1.0
    %v861 = vrcp.pop %v860
    %v862 = vmul.f32 1.0, %v861
    %864 = vrot.lane.b32.xlu0 %v852, 32
    %v865 = vpop.permute.xlu0 %864
    %v867 = vmul.f32 %v862, %v865
    %869 = vrot.lane.b32.xlu0 %v867, 64
    %v870 = vpop.permute.xlu0 %869
    %v872 = vadd.f32 %v852, %v870
    %v873 = vtanh.pop %v872
    %v874 = vsub.f32 %v725, %v873
    %876 = vrot.lane.b32.xlu0 %v874, 96
    %v877 = vpop.permute.xlu0 %876
    %v879 = vmul.f32 %v862, %v877
    %881 = vrot.lane.b32.xlu0 %v879, 32
    %v882 = vpop.permute.xlu0 %881
    %v884 = vadd.f32 %v873, %v882
    %886 = vrot.lane.b32.xlu0 %v884, 64
    %v887 = vpop.permute.xlu0 %886
    %890 = vrot.lane.b32.xlu0 %v806, 96
    %v891 = vpop.permute.xlu0 %890
    %v893 = vsel %vm227, %v887, %v891
    %v894 = vpack.c.bf16 %v893, %v893
    %v896 = vsel %vm254, %v894, 0
    %898 = vmatprep.subr.bf16.mxu0 0
    %899 = vmatpush1.bf16.msra.mxu0 %v246
    %900 = vmatprep.subr.bf16.mxu0 0
    %901 = vmatpush1.bf16.msra.mxu0 %v247
    %902 = vmatprep.subr.bf16.mxu0 0
    %903 = vmatpush1.bf16.msra.mxu0 %v248
    %904 = vmatprep.subr.bf16.mxu0 0
    %905 = vmatpush1.bf16.msra.mxu0 %v249
    %906 = vmatprep.subr.bf16.mxu0 0
    %907 = vmatpush1.bf16.msra.mxu0 0
    %908 = vmatprep.subr.bf16.mxu0 0
    %909 = vmatpush1.bf16.msra.mxu0 0
    %910 = vmatprep.subr.bf16.mxu0 0
    %911 = vmatpush1.bf16.msra.mxu0 0
    %912 = vmatprep.subr.bf16.mxu0 0
    %913 = vmatpush1.bf16.msra.mxu0 0
    %914 = vmatprep.subr.bf16.mxu0 0
    %915 = vmatpush1.bf16.msra.mxu0 0
    %916 = vmatprep.subr.bf16.mxu0 0
    %917 = vmatpush1.bf16.msra.mxu0 0
    %918 = vmatprep.subr.bf16.mxu0 0
    %919 = vmatpush1.bf16.msra.mxu0 0
    %920 = vmatprep.subr.bf16.mxu0 0
    %921 = vmatpush1.bf16.msra.mxu0 0
    %922 = vmatprep.subr.bf16.mxu0 0
    %923 = vmatpush1.bf16.msra.mxu0 0
    %924 = vmatprep.subr.bf16.mxu0 0
    %925 = vmatpush1.bf16.msra.mxu0 0
    %926 = vmatprep.subr.bf16.mxu0 0
    %927 = vmatpush1.bf16.msra.mxu0 0
    %928 = vmatprep.subr.bf16.mxu0 0
    %929 = vmatpush1.bf16.msra.mxu0 0
    %930 = vmatprep.mubr.bf16.mxu0 0
    %931 = vmatmul.mubr.bf16.gmra.mrb[0].mxu0 %v896
    %v932 = vpop.f32.mrb[0].mxu0
    %v933 = vadd.f32 %v112, %v932
    %v934 = vpop.f32.mrb[0].mxu0
    %v935 = vpop.f32.mrb[0].mxu0
    %v936 = vpop.f32.mrb[0].mxu0
    %937 = vdwg.mxu0
    %v938 = vxor.u32 %v933, 2147483648
    %v939 = vmul.f32 %v938, 1.442695
    %v940 = vpow.pop %v939
    %v941 = vadd.f32 %v940, 1.0
    %v942 = vrcp.pop %v941
    %v943 = vmul.f32 1.0, %v942
    %945 = vrot.lane.b32.xlu0 %v933, 32
    %v946 = vpop.permute.xlu0 %945
    %v948 = vmul.f32 %v943, %v946
    %950 = vrot.lane.b32.xlu0 %v948, 64
    %v951 = vpop.permute.xlu0 %950
    %v953 = vadd.f32 %v933, %v951
    %v954 = vtanh.pop %v953
    %v955 = vsub.f32 %v806, %v954
    %957 = vrot.lane.b32.xlu0 %v955, 96
    %v958 = vpop.permute.xlu0 %957
    %v960 = vmul.f32 %v943, %v958
    %962 = vrot.lane.b32.xlu0 %v960, 32
    %v963 = vpop.permute.xlu0 %962
    %v965 = vadd.f32 %v954, %v963
    %s966 = scalar_lea.vmem [#allocation2], 40
    %v967 = vld [vmem:[%s966] sm:$0xff]
    %968 = vrot.lane.b32.xlu0 %v884, 80
    %v969 = vpop.permute.xlu0 %968
    %v971 = vsel %vm122, %v967, %v969
    %v972 = vpack.c.bf16 %v971, %v971
    %v974 = vsel %vm143, %v972, 0
    %976 = vmatprep.subr.bf16.mxu0 0
    %977 = vmatpush1.bf16.msra.mxu0 %v137
    %978 = vmatprep.subr.bf16.mxu0 0
    %979 = vmatpush1.bf16.msra.mxu0 %v138
    %980 = vmatprep.subr.bf16.mxu0 0
    %981 = vmatpush1.bf16.msra.mxu0 %v139
    %982 = vmatprep.subr.bf16.mxu0 0
    %983 = vmatpush1.bf16.msra.mxu0 0
    %984 = vmatprep.subr.bf16.mxu0 0
    %985 = vmatpush1.bf16.msra.mxu0 0
    %986 = vmatprep.subr.bf16.mxu0 0
    %987 = vmatpush1.bf16.msra.mxu0 0
    %988 = vmatprep.subr.bf16.mxu0 0
    %989 = vmatpush1.bf16.msra.mxu0 0
    %990 = vmatprep.subr.bf16.mxu0 0
    %991 = vmatpush1.bf16.msra.mxu0 0
    %992 = vmatprep.subr.bf16.mxu0 0
    %993 = vmatpush1.bf16.msra.mxu0 0
    %994 = vmatprep.subr.bf16.mxu0 0
    %995 = vmatpush1.bf16.msra.mxu0 0
    %996 = vmatprep.subr.bf16.mxu0 0
    %997 = vmatpush1.bf16.msra.mxu0 0
    %998 = vmatprep.subr.bf16.mxu0 0
    %999 = vmatpush1.bf16.msra.mxu0 0
    %1000 = vmatprep.subr.bf16.mxu0 0
    %1001 = vmatpush1.bf16.msra.mxu0 0
    %1002 = vmatprep.subr.bf16.mxu0 0
    %1003 = vmatpush1.bf16.msra.mxu0 0
    %1004 = vmatprep.subr.bf16.mxu0 0
    %1005 = vmatpush1.bf16.msra.mxu0 0
    %1006 = vmatprep.subr.bf16.mxu0 0
    %1007 = vmatpush1.bf16.msra.mxu0 0
    %1008 = vmatprep.mubr.bf16.mxu0 0
    %1009 = vmatmul.mubr.bf16.gmra.mrb[0].mxu0 %v974
    %v1010 = vpop.f32.mrb[0].mxu0
    %v1011 = vadd.f32 %v105, %v1010
    %v1012 = vpop.f32.mrb[0].mxu0
    %v1013 = vpop.f32.mrb[0].mxu0
    %v1014 = vpop.f32.mrb[0].mxu0
    %1015 = vdwg.mxu0
    %v1016 = vxor.u32 %v1011, 2147483648
    %v1017 = vmul.f32 %v1016, 1.442695
    %v1018 = vpow.pop %v1017
    %v1019 = vadd.f32 %v1018, 1.0
    %v1020 = vrcp.pop %v1019
    %v1021 = vmul.f32 1.0, %v1020
    %1023 = vrot.lane.b32.xlu0 %v1011, 32
    %v1024 = vpop.permute.xlu0 %1023
    %v1026 = vmul.f32 %v1021, %v1024
    %1028 = vrot.lane.b32.xlu0 %v1026, 64
    %v1029 = vpop.permute.xlu0 %1028
    %v1031 = vadd.f32 %v1011, %v1029
    %v1032 = vtanh.pop %v1031
    %v1033 = vsub.f32 %v884, %v1032
    %1035 = vrot.lane.b32.xlu0 %v1033, 96
    %v1036 = vpop.permute.xlu0 %1035
    %v1038 = vmul.f32 %v1021, %v1036
    %1040 = vrot.lane.b32.xlu0 %v1038, 32
    %v1041 = vpop.permute.xlu0 %1040
    %v1043 = vadd.f32 %v1032, %v1041
    %1045 = vrot.lane.b32.xlu0 %v1043, 64
    %v1046 = vpop.permute.xlu0 %1045
    %1049 = vrot.lane.b32.xlu0 %v965, 96
    %v1050 = vpop.permute.xlu0 %1049
    %v1052 = vsel %vm227, %v1046, %v1050
    %v1053 = vpack.c.bf16 %v1052, %v1052
    %v1055 = vsel %vm254, %v1053, 0
    %1057 = vmatprep.subr.bf16.mxu0 0
    %1058 = vmatpush1.bf16.msra.mxu0 %v246
    %1059 = vmatprep.subr.bf16.mxu0 0
    %1060 = vmatpush1.bf16.msra.mxu0 %v247
    %1061 = vmatprep.subr.bf16.mxu0 0
    %1062 = vmatpush1.bf16.msra.mxu0 %v248
    %1063 = vmatprep.subr.bf16.mxu0 0
    %1064 = vmatpush1.bf16.msra.mxu0 %v249
    %1065 = vmatprep.subr.bf16.mxu0 0
    %1066 = vmatpush1.bf16.msra.mxu0 0
    %1067 = vmatprep.subr.bf16.mxu0 0
    %1068 = vmatpush1.bf16.msra.mxu0 0
    %1069 = vmatprep.subr.bf16.mxu0 0
    %1070 = vmatpush1.bf16.msra.mxu0 0
    %1071 = vmatprep.subr.bf16.mxu0 0
    %1072 = vmatpush1.bf16.msra.mxu0 0
    %1073 = vmatprep.subr.bf16.mxu0 0
    %1074 = vmatpush1.bf16.msra.mxu0 0
    %1075 = vmatprep.subr.bf16.mxu0 0
    %1076 = vmatpush1.bf16.msra.mxu0 0
    %1077 = vmatprep.subr.bf16.mxu0 0
    %1078 = vmatpush1.bf16.msra.mxu0 0
    %1079 = vmatprep.subr.bf16.mxu0 0
    %1080 = vmatpush1.bf16.msra.mxu0 0
    %1081 = vmatprep.subr.bf16.mxu0 0
    %1082 = vmatpush1.bf16.msra.mxu0 0
    %1083 = vmatprep.subr.bf16.mxu0 0
    %1084 = vmatpush1.bf16.msra.mxu0 0
    %1085 = vmatprep.subr.bf16.mxu0 0
    %1086 = vmatpush1.bf16.msra.mxu0 0
    %1087 = vmatprep.subr.bf16.mxu0 0
    %1088 = vmatpush1.bf16.msra.mxu0 0
    %1089 = vmatprep.mubr.bf16.mxu0 0
    %1090 = vmatmul.mubr.bf16.gmra.mrb[0].mxu0 %v1055
    %v1091 = vpop.f32.mrb[0].mxu0
    %v1092 = vadd.f32 %v112, %v1091
    %v1093 = vpop.f32.mrb[0].mxu0
    %v1094 = vpop.f32.mrb[0].mxu0
    %v1095 = vpop.f32.mrb[0].mxu0
    %1096 = vdwg.mxu0
    %v1097 = vxor.u32 %v1092, 2147483648
    %v1098 = vmul.f32 %v1097, 1.442695
    %v1099 = vpow.pop %v1098
    %v1100 = vadd.f32 %v1099, 1.0
    %v1101 = vrcp.pop %v1100
    %v1102 = vmul.f32 1.0, %v1101
    %1104 = vrot.lane.b32.xlu0 %v1092, 32
    %v1105 = vpop.permute.xlu0 %1104
    %v1107 = vmul.f32 %v1102, %v1105
    %1109 = vrot.lane.b32.xlu0 %v1107, 64
    %v1110 = vpop.permute.xlu0 %1109
    %v1112 = vadd.f32 %v1092, %v1110
    %v1113 = vtanh.pop %v1112
    %v1114 = vsub.f32 %v965, %v1113
    %1116 = vrot.lane.b32.xlu0 %v1114, 96
    %v1117 = vpop.permute.xlu0 %1116
    %v1119 = vmul.f32 %v1102, %v1117
    %1121 = vrot.lane.b32.xlu0 %v1119, 32
    %v1122 = vpop.permute.xlu0 %1121
    %v1124 = vadd.f32 %v1113, %v1122
    %s1125 = scalar_lea.vmem [#allocation2], 48
    %v1126 = vld [vmem:[%s1125] sm:$0xff]
    %1127 = vrot.lane.b32.xlu0 %v1043, 80
    %v1128 = vpop.permute.xlu0 %1127
    %v1130 = vsel %vm122, %v1126, %v1128
    %v1131 = vpack.c.bf16 %v1130, %v1130
    %v1133 = vsel %vm143, %v1131, 0
    %1135 = vmatprep.subr.bf16.mxu0 0
    %1136 = vmatpush1.bf16.msra.mxu0 %v137
    %1137 = vmatprep.subr.bf16.mxu0 0
    %1138 = vmatpush1.bf16.msra.mxu0 %v138
    %1139 = vmatprep.subr.bf16.mxu0 0
    %1140 = vmatpush1.bf16.msra.mxu0 %v139
    %1141 = vmatprep.subr.bf16.mxu0 0
    %1142 = vmatpush1.bf16.msra.mxu0 0
    %1143 = vmatprep.subr.bf16.mxu0 0
    %1144 = vmatpush1.bf16.msra.mxu0 0
    %1145 = vmatprep.subr.bf16.mxu0 0
    %1146 = vmatpush1.bf16.msra.mxu0 0
    %1147 = vmatprep.subr.bf16.mxu0 0
    %1148 = vmatpush1.bf16.msra.mxu0 0
    %1149 = vmatprep.subr.bf16.mxu0 0
    %1150 = vmatpush1.bf16.msra.mxu0 0
    %1151 = vmatprep.subr.bf16.mxu0 0
    %1152 = vmatpush1.bf16.msra.mxu0 0
    %1153 = vmatprep.subr.bf16.mxu0 0
    %1154 = vmatpush1.bf16.msra.mxu0 0
    %1155 = vmatprep.subr.bf16.mxu0 0
    %1156 = vmatpush1.bf16.msra.mxu0 0
    %1157 = vmatprep.subr.bf16.mxu0 0
    %1158 = vmatpush1.bf16.msra.mxu0 0
    %1159 = vmatprep.subr.bf16.mxu0 0
    %1160 = vmatpush1.bf16.msra.mxu0 0
    %1161 = vmatprep.subr.bf16.mxu0 0
    %1162 = vmatpush1.bf16.msra.mxu0 0
    %1163 = vmatprep.subr.bf16.mxu0 0
    %1164 = vmatpush1.bf16.msra.mxu0 0
    %1165 = vmatprep.subr.bf16.mxu0 0
    %1166 = vmatpush1.bf16.msra.mxu0 0
    %1167 = vmatprep.mubr.bf16.mxu0 0
    %1168 = vmatmul.mubr.bf16.gmra.mrb[0].mxu0 %v1133
    %v1169 = vpop.f32.mrb[0].mxu0
    %v1170 = vadd.f32 %v105, %v1169
    %v1171 = vpop.f32.mrb[0].mxu0
    %v1172 = vpop.f32.mrb[0].mxu0
    %v1173 = vpop.f32.mrb[0].mxu0
    %1174 = vdwg.mxu0
    %v1175 = vxor.u32 %v1170, 2147483648
    %v1176 = vmul.f32 %v1175, 1.442695
    %v1177 = vpow.pop %v1176
    %v1178 = vadd.f32 %v1177, 1.0
    %v1179 = vrcp.pop %v1178
    %v1180 = vmul.f32 1.0, %v1179
    %1182 = vrot.lane.b32.xlu0 %v1170, 32
    %v1183 = vpop.permute.xlu0 %1182
    %v1185 = vmul.f32 %v1180, %v1183
    %1187 = vrot.lane.b32.xlu0 %v1185, 64
    %v1188 = vpop.permute.xlu0 %1187
    %v1190 = vadd.f32 %v1170, %v1188
    %v1191 = vtanh.pop %v1190
    %v1192 = vsub.f32 %v1043, %v1191
    %1194 = vrot.lane.b32.xlu0 %v1192, 96
    %v1195 = vpop.permute.xlu0 %1194
    %v1197 = vmul.f32 %v1180, %v1195
    %1199 = vrot.lane.b32.xlu0 %v1197, 32
    %v1200 = vpop.permute.xlu0 %1199
    %v1202 = vadd.f32 %v1191, %v1200
    %1204 = vrot.lane.b32.xlu0 %v1202, 64
    %v1205 = vpop.permute.xlu0 %1204
    %1208 = vrot.lane.b32.xlu0 %v1124, 96
    %v1209 = vpop.permute.xlu0 %1208
    %v1211 = vsel %vm227, %v1205, %v1209
    %v1212 = vpack.c.bf16 %v1211, %v1211
    %v1214 = vsel %vm254, %v1212, 0
    %1216 = vmatprep.subr.bf16.mxu0 0
    %1217 = vmatpush1.bf16.msra.mxu0 %v246
    %1218 = vmatprep.subr.bf16.mxu0 0
    %1219 = vmatpush1.bf16.msra.mxu0 %v247
    %1220 = vmatprep.subr.bf16.mxu0 0
    %1221 = vmatpush1.bf16.msra.mxu0 %v248
    %1222 = vmatprep.subr.bf16.mxu0 0
    %1223 = vmatpush1.bf16.msra.mxu0 %v249
    %1224 = vmatprep.subr.bf16.mxu0 0
    %1225 = vmatpush1.bf16.msra.mxu0 0
    %1226 = vmatprep.subr.bf16.mxu0 0
    %1227 = vmatpush1.bf16.msra.mxu0 0
    %1228 = vmatprep.subr.bf16.mxu0 0
    %1229 = vmatpush1.bf16.msra.mxu0 0
    %1230 = vmatprep.subr.bf16.mxu0 0
    %1231 = vmatpush1.bf16.msra.mxu0 0
    %1232 = vmatprep.subr.bf16.mxu0 0
    %1233 = vmatpush1.bf16.msra.mxu0 0
    %1234 = vmatprep.subr.bf16.mxu0 0
    %1235 = vmatpush1.bf16.msra.mxu0 0
    %1236 = vmatprep.subr.bf16.mxu0 0
    %1237 = vmatpush1.bf16.msra.mxu0 0
    %1238 = vmatprep.subr.bf16.mxu0 0
    %1239 = vmatpush1.bf16.msra.mxu0 0
    %1240 = vmatprep.subr.bf16.mxu0 0
    %1241 = vmatpush1.bf16.msra.mxu0 0
    %1242 = vmatprep.subr.bf16.mxu0 0
    %1243 = vmatpush1.bf16.msra.mxu0 0
    %1244 = vmatprep.subr.bf16.mxu0 0
    %1245 = vmatpush1.bf16.msra.mxu0 0
    %1246 = vmatprep.subr.bf16.mxu0 0
    %1247 = vmatpush1.bf16.msra.mxu0 0
    %1248 = vmatprep.mubr.bf16.mxu0 0
    %1249 = vmatmul.mubr.bf16.gmra.mrb[0].mxu0 %v1214
    %v1250 = vpop.f32.mrb[0].mxu0
    %v1251 = vadd.f32 %v112, %v1250
    %v1252 = vpop.f32.mrb[0].mxu0
    %v1253 = vpop.f32.mrb[0].mxu0
    %v1254 = vpop.f32.mrb[0].mxu0
    %1255 = vdwg.mxu0
    %v1256 = vxor.u32 %v1251, 2147483648
    %v1257 = vmul.f32 %v1256, 1.442695
    %v1258 = vpow.pop %v1257
    %v1259 = vadd.f32 %v1258, 1.0
    %v1260 = vrcp.pop %v1259
    %v1261 = vmul.f32 1.0, %v1260
    %1263 = vrot.lane.b32.xlu0 %v1251, 32
    %v1264 = vpop.permute.xlu0 %1263
    %v1266 = vmul.f32 %v1261, %v1264
    %1268 = vrot.lane.b32.xlu0 %v1266, 64
    %v1269 = vpop.permute.xlu0 %1268
    %v1271 = vadd.f32 %v1251, %v1269
    %v1272 = vtanh.pop %v1271
    %v1273 = vsub.f32 %v1124, %v1272
    %1275 = vrot.lane.b32.xlu0 %v1273, 96
    %v1276 = vpop.permute.xlu0 %1275
    %v1278 = vmul.f32 %v1261, %v1276
    %1280 = vrot.lane.b32.xlu0 %v1278, 32
    %v1281 = vpop.permute.xlu0 %1280
    %v1283 = vadd.f32 %v1272, %v1281
    %s1284 = scalar_lea.vmem [#allocation2], 56
    %v1285 = vld [vmem:[%s1284] sm:$0xff]
    %1286 = vrot.lane.b32.xlu0 %v1202, 80
    %v1287 = vpop.permute.xlu0 %1286
    %v1289 = vsel %vm122, %v1285, %v1287
    %v1290 = vpack.c.bf16 %v1289, %v1289
    %v1292 = vsel %vm143, %v1290, 0
    %1294 = vmatprep.subr.bf16.mxu0 0
    %1295 = vmatpush1.bf16.msra.mxu0 %v137
    %1296 = vmatprep.subr.bf16.mxu0 0
    %1297 = vmatpush1.bf16.msra.mxu0 %v138
    %1298 = vmatprep.subr.bf16.mxu0 0
    %1299 = vmatpush1.bf16.msra.mxu0 %v139
    %1300 = vmatprep.subr.bf16.mxu0 0
    %1301 = vmatpush1.bf16.msra.mxu0 0
    %1302 = vmatprep.subr.bf16.mxu0 0
    %1303 = vmatpush1.bf16.msra.mxu0 0
    %1304 = vmatprep.subr.bf16.mxu0 0
    %1305 = vmatpush1.bf16.msra.mxu0 0
    %1306 = vmatprep.subr.bf16.mxu0 0
    %1307 = vmatpush1.bf16.msra.mxu0 0
    %1308 = vmatprep.subr.bf16.mxu0 0
    %1309 = vmatpush1.bf16.msra.mxu0 0
    %1310 = vmatprep.subr.bf16.mxu0 0
    %1311 = vmatpush1.bf16.msra.mxu0 0
    %1312 = vmatprep.subr.bf16.mxu0 0
    %1313 = vmatpush1.bf16.msra.mxu0 0
    %1314 = vmatprep.subr.bf16.mxu0 0
    %1315 = vmatpush1.bf16.msra.mxu0 0
    %1316 = vmatprep.subr.bf16.mxu0 0
    %1317 = vmatpush1.bf16.msra.mxu0 0
    %1318 = vmatprep.subr.bf16.mxu0 0
    %1319 = vmatpush1.bf16.msra.mxu0 0
    %1320 = vmatprep.subr.bf16.mxu0 0
    %1321 = vmatpush1.bf16.msra.mxu0 0
    %1322 = vmatprep.subr.bf16.mxu0 0
    %1323 = vmatpush1.bf16.msra.mxu0 0
    %1324 = vmatprep.subr.bf16.mxu0 0
    %1325 = vmatpush1.bf16.msra.mxu0 0
    %1326 = vmatprep.mubr.bf16.mxu0 0
    %1327 = vmatmul.mubr.bf16.gmra.mrb[0].mxu0 %v1292
    %v1328 = vpop.f32.mrb[0].mxu0
    %v1329 = vadd.f32 %v105, %v1328
    %v1330 = vpop.f32.mrb[0].mxu0
    %v1331 = vpop.f32.mrb[0].mxu0
    %v1332 = vpop.f32.mrb[0].mxu0
    %1333 = vdwg.mxu0
    %v1334 = vxor.u32 %v1329, 2147483648
    %v1335 = vmul.f32 %v1334, 1.442695
    %v1336 = vpow.pop %v1335
    %v1337 = vadd.f32 %v1336, 1.0
    %v1338 = vrcp.pop %v1337
    %v1339 = vmul.f32 1.0, %v1338
    %1341 = vrot.lane.b32.xlu0 %v1329, 32
    %v1342 = vpop.permute.xlu0 %1341
    %v1344 = vmul.f32 %v1339, %v1342
    %1346 = vrot.lane.b32.xlu0 %v1344, 64
    %v1347 = vpop.permute.xlu0 %1346
    %v1349 = vadd.f32 %v1329, %v1347
    %v1350 = vtanh.pop %v1349
    %v1351 = vsub.f32 %v1202, %v1350
    %1353 = vrot.lane.b32.xlu0 %v1351, 96
    %v1354 = vpop.permute.xlu0 %1353
    %v1356 = vmul.f32 %v1339, %v1354
    %1358 = vrot.lane.b32.xlu0 %v1356, 32
    %v1359 = vpop.permute.xlu0 %1358
    %v1361 = vadd.f32 %v1350, %v1359
    %1363 = vrot.lane.b32.xlu0 %v1361, 64
    %v1364 = vpop.permute.xlu0 %1363
    %1367 = vrot.lane.b32.xlu0 %v1283, 96
    %v1368 = vpop.permute.xlu0 %1367
    %v1370 = vsel %vm227, %v1364, %v1368
    %v1371 = vpack.c.bf16 %v1370, %v1370
    %v1373 = vsel %vm254, %v1371, 0
    %1375 = vmatprep.subr.bf16.mxu0 0
    %1376 = vmatpush1.bf16.msra.mxu0 %v246
    %1377 = vmatprep.subr.bf16.mxu0 0
    %1378 = vmatpush1.bf16.msra.mxu0 %v247
    %1379 = vmatprep.subr.bf16.mxu0 0
    %1380 = vmatpush1.bf16.msra.mxu0 %v248
    %1381 = vmatprep.subr.bf16.mxu0 0
    %1382 = vmatpush1.bf16.msra.mxu0 %v249
    %1383 = vmatprep.subr.bf16.mxu0 0
    %1384 = vmatpush1.bf16.msra.mxu0 0
    %1385 = vmatprep.subr.bf16.mxu0 0
    %1386 = vmatpush1.bf16.msra.mxu0 0
    %1387 = vmatprep.subr.bf16.mxu0 0
    %1388 = vmatpush1.bf16.msra.mxu0 0
    %1389 = vmatprep.subr.bf16.mxu0 0
    %1390 = vmatpush1.bf16.msra.mxu0 0
    %1391 = vmatprep.subr.bf16.mxu0 0
    %1392 = vmatpush1.bf16.msra.mxu0 0
    %1393 = vmatprep.subr.bf16.mxu0 0
    %1394 = vmatpush1.bf16.msra.mxu0 0
    %1395 = vmatprep.subr.bf16.mxu0 0
    %1396 = vmatpush1.bf16.msra.mxu0 0
    %1397 = vmatprep.subr.bf16.mxu0 0
    %1398 = vmatpush1.bf16.msra.mxu0 0
    %1399 = vmatprep.subr.bf16.mxu0 0
    %1400 = vmatpush1.bf16.msra.mxu0 0
    %1401 = vmatprep.subr.bf16.mxu0 0
    %1402 = vmatpush1.bf16.msra.mxu0 0
    %1403 = vmatprep.subr.bf16.mxu0 0
    %1404 = vmatpush1.bf16.msra.mxu0 0
    %1405 = vmatprep.subr.bf16.mxu0 0
    %1406 = vmatpush1.bf16.msra.mxu0 0
    %1407 = vmatprep.mubr.bf16.mxu0 0
    %1408 = vmatmul.mubr.bf16.gmra.mrb[0].mxu0 %v1373
    %v1409 = vpop.f32.mrb[0].mxu0
    %v1410 = vadd.f32 %v112, %v1409
    %v1411 = vpop.f32.mrb[0].mxu0
    %v1412 = vpop.f32.mrb[0].mxu0
    %v1413 = vpop.f32.mrb[0].mxu0
    %1414 = vdwg.mxu0
    %v1415 = vxor.u32 %v1410, 2147483648
    %v1416 = vmul.f32 %v1415, 1.442695
    %v1417 = vpow.pop %v1416
    %v1418 = vadd.f32 %v1417, 1.0
    %v1419 = vrcp.pop %v1418
    %v1420 = vmul.f32 1.0, %v1419
    %1422 = vrot.lane.b32.xlu0 %v1410, 32
    %v1423 = vpop.permute.xlu0 %1422
    %v1425 = vmul.f32 %v1420, %v1423
    %1427 = vrot.lane.b32.xlu0 %v1425, 64
    %v1428 = vpop.permute.xlu0 %1427
    %v1430 = vadd.f32 %v1410, %v1428
    %v1431 = vtanh.pop %v1430
    %v1432 = vsub.f32 %v1283, %v1431
    %1434 = vrot.lane.b32.xlu0 %v1432, 96
    %v1435 = vpop.permute.xlu0 %1434
    %v1437 = vmul.f32 %v1420, %v1435
    %1439 = vrot.lane.b32.xlu0 %v1437, 32
    %v1440 = vpop.permute.xlu0 %1439
    %v1442 = vadd.f32 %v1431, %v1440
    %v1443 = vld [vmem:[%s7] sm:$0x1]
    %v1445 = vlaneseq
    %v1446 = vshrl.u32 %v1445, 7
    %v1447 = vsub.s32 0, %v1446
    %v1448 = vrot.slane %v1443, %v1447
    %v1450 = vpack.c.bf16 %v1442, %v1442
    %v1451 = vld [vmem:[%s6] sm:$0xf]
    %v1452 = vld [vmem:[%s6 + $0x4] sm:$0xf]
    %v1453 = vld [vmem:[%s6 + $0x8] sm:$0xf]
    %v1454 = vld [vmem:[%s6 + $0xc] sm:$0xf]
    %1456 = vrot.lane.b32.xlu0 %v1450, 64
    %v1457 = vpop.permute.xlu0 %1456
    %v1462 = vunpack.c.l.b16 %v1451
    %v1463 = vunpack.c.l.b16 %v1452
    %v1464 = vunpack.c.l.b16 %v1453
    %v1465 = vunpack.c.l.b16 %v1454
    %v1466 = vpack.c.b16 %v1463, %v1462
    %v1467 = vpack.c.b16 %v1465, %v1464
    %v1471 = vsel %vm227, %v1457, 0
    %1473 = vmatprep.subr.bf16.mxu0 0
    %1474 = vmatpush1.bf16.msra.mxu0 %v1466
    %1475 = vmatprep.subr.bf16.mxu0 0
    %1476 = vmatpush1.bf16.msra.mxu0 %v1467
    %1477 = vmatprep.subr.bf16.mxu0 0
    %1478 = vmatpush1.bf16.msra.mxu0 0
    %1479 = vmatprep.subr.bf16.mxu0 0
    %1480 = vmatpush1.bf16.msra.mxu0 0
    %1481 = vmatprep.subr.bf16.mxu0 0
    %1482 = vmatpush1.bf16.msra.mxu0 0
    %1483 = vmatprep.subr.bf16.mxu0 0
    %1484 = vmatpush1.bf16.msra.mxu0 0
    %1485 = vmatprep.subr.bf16.mxu0 0
    %1486 = vmatpush1.bf16.msra.mxu0 0
    %1487 = vmatprep.subr.bf16.mxu0 0
    %1488 = vmatpush1.bf16.msra.mxu0 0
    %1489 = vmatprep.subr.bf16.mxu0 0
    %1490 = vmatpush1.bf16.msra.mxu0 0
    %1491 = vmatprep.subr.bf16.mxu0 0
    %1492 = vmatpush1.bf16.msra.mxu0 0
    %1493 = vmatprep.subr.bf16.mxu0 0
    %1494 = vmatpush1.bf16.msra.mxu0 0
    %1495 = vmatprep.subr.bf16.mxu0 0
    %1496 = vmatpush1.bf16.msra.mxu0 0
    %1497 = vmatprep.subr.bf16.mxu0 0
    %1498 = vmatpush1.bf16.msra.mxu0 0
    %1499 = vmatprep.subr.bf16.mxu0 0
    %1500 = vmatpush1.bf16.msra.mxu0 0
    %1501 = vmatprep.subr.bf16.mxu0 0
    %1502 = vmatpush1.bf16.msra.mxu0 0
    %1503 = vmatprep.subr.bf16.mxu0 0
    %1504 = vmatpush1.bf16.msra.mxu0 0
    %1505 = vmatprep.mubr.bf16.mxu0 0
    %1506 = vmatmul.mubr.bf16.gmra.mrb[0].mxu0 %v1471
    %v1507 = vpop.f32.mrb[0].mxu0
    %v1508 = vadd.f32 %v1448, %v1507
    %v1509 = vpop.f32.mrb[0].mxu0
    %v1510 = vpop.f32.mrb[0].mxu0
    %v1511 = vpop.f32.mrb[0].mxu0
    %1512 = vdwg.mxu0
    %1513 = vrot.lane.b32.xlu0 %v1361, 96
    %v1514 = vpop.permute.xlu0 %1513
    %v1516 = vsel %vm227, %v1508, %v1514
    %v1517 = vsel %vm254, %v1516, %v1442
    %vm1518 = vcmask 785408
    %v1519 = vsel %vm1518, %v1517, 0.0
    %1520 = vst [vmem:[#allocation10] sm:$0xff] %v1519
    // Predicated region
    $region50: #{tpu_custom_call.1} parent=1 // pred_check
      _
    $region51: #{tpu_custom_call.1} parent=1 // pred_check_branch
      %1522 = sbr.rel (0) target = $region53
    $region52: #{tpu_custom_call.1} parent=1 // pred_region
      %s1524 = ssub.s32 128, 128
      %1525 = vsyncadd [#allocation4], %s1524
      %s1527 = sshll.u32 [#allocation10], 4
      %s1528 = int_to_ptr.vmem [resolvable:$true] %s1527
      %1530 = dma.vmem_to_hbm [thread:$0]  %s1528, 128, %s8, [#allocation4]
    $region53: #{tpu_custom_call.1} parent=1 // pred_fallthru
      _
    // Predicated region
    $region54: #{tpu_custom_call.1} parent=1 // pred_check
      _
    $region55: #{tpu_custom_call.1} parent=1 // pred_check_branch
      %1532 = sbr.rel (0) target = $region57
    $region56: #{tpu_custom_call.1} parent=1 // pred_region
      %1533 = dma.done [#allocation4], 128
    $region57: #{tpu_custom_call.1} parent=1 // pred_fallthru
      _
    %1534 = vsyncpa [#allocation3], 1
    %1535 = vsyncpa [#allocation6], 1
    %1536 = vsyncpa [#allocation9], 1
    %1537 = vsyncpa [#allocation4], 1

</llo_original>
